<compile_context>
chip_gen: v7x
topology: tpu7x:2x2x1
jax: 0.10.0
libtpu: 0.0.40
codegen_flags: <defaults>
</compile_context>

<pallas_src>
import functools

import jax
import jax.numpy as jnp
from jax.experimental import pallas as pl
from jax.experimental.pallas import tpu as pltpu


def _valnet_kernel(x_ref,                 # (block_b, F)   compute dtype
                   w1_ref, b1_ref,        # (128, F),  (128, 1)
                   w2_ref, b2_ref,        # (128, 128),(128, 1)
                   w3_ref, b3_ref,        # (64, 128), (64, 1)
                   w4_ref, b4_ref,        # (64, 64),  (64, 1)
                   o_ref,                 # (1, block_b)   f32
                   *, softplus_dtype):
    cd = w1_ref.dtype  # MXU input dtype (f32 or bf16)

    def softplus(z):
        # torch.nn.Softplus (beta=1, threshold=20): identity above 20,
        # log1p(exp(z)) otherwise.  Transcendentals optionally in bf16
        # (v6e/v7x EUP); the select and everything downstream stay f32.
        zt = z.astype(softplus_dtype)
        sp = jnp.log1p(jnp.exp(jnp.minimum(zt, 20.0))).astype(jnp.float32)
        return jnp.where(z > 20.0, z, sp)

    # Layer 1: contract W1 (128, F) with the x tile (block_b, F) over their
    # feature axes -> (128, block_b).  The x transpose is absorbed on-chip.
    z = jax.lax.dot_general(
        w1_ref[...], x_ref[...],
        dimension_numbers=(((1,), (1,)), ((), ())),
        preferred_element_type=jnp.float32)
    a = softplus(z + b1_ref[...])           # biases are f32, (out, 1)

    def layer(w_ref, b_ref, act):
        z = jnp.dot(w_ref[...], act.astype(cd),
                    preferred_element_type=jnp.float32)
        return softplus(z + b_ref[...])      # f32, (out, block_b)

    a = layer(w2_ref, b2_ref, a)
    a = layer(w3_ref, b3_ref, a)
    a = layer(w4_ref, b4_ref, a)

    # Squared L2 norm over features (sublane axis) -> lane-dense (1, block_b).
    o_ref[...] = jnp.sum(a * a, axis=0, keepdims=True)


def _round_up(v, m):
    return -(-v // m) * m


def simple_quadratic_valnet(x, params, normalization_const=None, *,
                            block_b=2048, compute_dtype=jnp.float32,
                            softplus_dtype=jnp.float32):
    """Fused forward pass of SimpleQuadraticValNet.

    x:       (B, num_features) float32.
    params:  list of (W, b) with W shape (out, in) and b shape (out, 1)
             (PyTorch nn.Linear layout).
    block_b: batch tile on the lane axis; positive multiple of 256.  It is
             auto-clamped so the grid has >= 2 steps when B > 256 (keeps both
             v7x TensorCores busy) and capped at 4096 for VMEM headroom.
    compute_dtype: MXU input dtype.  jnp.float32 (default, matches the f32
             reference to ~1e-5) or jnp.bfloat16 (recommended on v5e/v6e/v7x
             when a ~1e-2 relative tolerance is acceptable); accumulation,
             bias add, softplus select and the final reduction stay in f32.
    softplus_dtype: dtype for the exp/log1p transcendentals.  jnp.bfloat16 is
             ~2x faster on the v6e/v7x EUP; keep f32 on v5e.
    """
    B, F = x.shape
    (w1, b1), (w2, b2), (w3, b3), (w4, b4) = params

    # Fold the normalization constant into the first layer: W1 @ (x/c) == (W1/c) @ x.
    if normalization_const is not None:
        w1 = w1 * (1.0 / normalization_const)

    bb = int(block_b)
    assert bb > 0 and bb % 256 == 0, "block_b must be a positive multiple of 256"
    bb = min(bb, 4096)                               # VMEM cap (v7x has 64 MiB)
    if B > 256:
        # Ensure >= 2 grid steps so the 'parallel' axis spans both v7x cores.
        bb = min(bb, _round_up(_round_up(B, 2) // 2, 256))

    n_blocks = pl.cdiv(B, bb)
    Bp = n_blocks * bb

    # Pad batch rows to a tile multiple; padded rows are independent of the
    # real ones and are sliced off below.
    xp = x if Bp == B else jnp.pad(x, ((0, Bp - B), (0, 0)))
    xp = xp.astype(compute_dtype)

    if compute_dtype != jnp.float32:
        w1, w2, w3, w4 = (w.astype(compute_dtype) for w in (w1, w2, w3, w4))
    # Biases stay f32 (added to the f32 accumulator).

    def wspec(arr):
        # Constant index_map -> fetched once, VMEM-resident for the whole grid.
        return pl.BlockSpec(arr.shape, lambda i: (0, 0))

    out = pl.pallas_call(
        functools.partial(_valnet_kernel, softplus_dtype=softplus_dtype),
        out_shape=jax.ShapeDtypeStruct((1, Bp), jnp.float32),
        grid_spec=pltpu.PrefetchScalarGridSpec(
            num_scalar_prefetch=0,
            grid=(n_blocks,),
            in_specs=[
                pl.BlockSpec((bb, F), lambda i: (i, 0)),    # x tile (no pre-transpose)
                wspec(w1), wspec(b1),
                wspec(w2), wspec(b2),
                wspec(w3), wspec(b3),
                wspec(w4), wspec(b4),
            ],
            out_specs=pl.BlockSpec((1, bb), lambda i: (0, i)),
        ),
        compiler_params=pltpu.CompilerParams(
            dimension_semantics=("parallel",)),
    )(xp, w1, b1, w2, b2, w3, b3, w4, b4)

    return out.reshape(-1)[:B]


def init_params(key, num_features, hidden_layer_sizes=(128, 128, 64, 64)):
    """nn.Linear-style init; W stored (out, in), b stored (out, 1)."""
    sizes = [num_features] + list(hidden_layer_sizes)
    params = []
    for i in range(len(sizes) - 1):
        key, kw, kb = jax.random.split(key, 3)
        scale = float(1.0 / (sizes[i] ** 0.5))
        w = jax.random.uniform(kw, (sizes[i + 1], sizes[i]),
                               minval=-scale, maxval=scale, dtype=jnp.float32)
        b = jax.random.uniform(kb, (sizes[i + 1], 1),
                               minval=-scale, maxval=scale, dtype=jnp.float32)
        params.append((w, b))
    return params


def reference_forward(x, params, normalization_const=None):
    h = x if normalization_const is None else x / normalization_const
    for w, b in params:
        h = jax.nn.softplus(h @ w.T + b[:, 0])
    return jnp.sum(h * h, axis=1)


if __name__ == "__main__":
    key = jax.random.PRNGKey(0)
    num_features = 16
    batch = 8
    norm_const = 4.0

    kx, kp = jax.random.split(key)
    x = jax.random.normal(kx, (batch, num_features), dtype=jnp.float32)
    params = init_params(kp, num_features)

    # Small demo batch: a single 256-wide (padded) tile.  Production batches
    # should use the defaults (block_b=2048, auto-clamped to >= 2 grid steps).
    out = simple_quadratic_valnet(x, params, normalization_const=norm_const,
                                  block_b=256)
    out = jax.block_until_ready(out)

    ref = reference_forward(x, params, normalization_const=norm_const)
    assert out.shape == (batch,)
    assert jnp.allclose(out, ref, rtol=1e-5, atol=1e-5)

    print("KERNEL_OK")
</pallas_src>

<mosaic_0001>
module attributes {stable_mosaic.version = 11 : i64} {
  func.func @_valnet_kernel(%arg0: i32, %arg1: memref<256x16xf32, #tpu.memory_space<vmem>>, %arg2: memref<128x16xf32, #tpu.memory_space<vmem>>, %arg3: memref<128x1xf32, #tpu.memory_space<vmem>>, %arg4: memref<128x128xf32, #tpu.memory_space<vmem>>, %arg5: memref<128x1xf32, #tpu.memory_space<vmem>>, %arg6: memref<64x128xf32, #tpu.memory_space<vmem>>, %arg7: memref<64x1xf32, #tpu.memory_space<vmem>>, %arg8: memref<64x64xf32, #tpu.memory_space<vmem>>, %arg9: memref<64x1xf32, #tpu.memory_space<vmem>>, %arg10: memref<1x256xf32, #tpu.memory_space<vmem>>) attributes {dimension_semantics = [#tpu.dimension_semantics<parallel>], iteration_bounds = array<i64: 1>, scalar_prefetch = 0 : i64, scratch_operands = 0 : i64, tpu.core_type = #tpu.core_type<tc>, window_params = [{transform_indices = @transform_0, window_bounds = array<i64: 256, 16>}, {pipeline_mode = #tpu.pipeline_mode<synchronous>, transform_indices = @transform_1, window_bounds = array<i64: 128, 16>}, {pipeline_mode = #tpu.pipeline_mode<synchronous>, transform_indices = @transform_2, window_bounds = array<i64: 128, 1>}, {pipeline_mode = #tpu.pipeline_mode<synchronous>, transform_indices = @transform_3, window_bounds = array<i64: 128, 128>}, {pipeline_mode = #tpu.pipeline_mode<synchronous>, transform_indices = @transform_4, window_bounds = array<i64: 128, 1>}, {pipeline_mode = #tpu.pipeline_mode<synchronous>, transform_indices = @transform_5, window_bounds = array<i64: 64, 128>}, {pipeline_mode = #tpu.pipeline_mode<synchronous>, transform_indices = @transform_6, window_bounds = array<i64: 64, 1>}, {pipeline_mode = #tpu.pipeline_mode<synchronous>, transform_indices = @transform_7, window_bounds = array<i64: 64, 64>}, {pipeline_mode = #tpu.pipeline_mode<synchronous>, transform_indices = @transform_8, window_bounds = array<i64: 64, 1>}, {transform_indices = @transform_9, window_bounds = array<i64: 1, 256>}]} {
    %c0 = arith.constant 0 : index
    %c0_0 = arith.constant 0 : index
    %0 = vector.load %arg2[%c0, %c0_0] : memref<128x16xf32, #tpu.memory_space<vmem>>, vector<128x16xf32>
    %c0_1 = arith.constant 0 : index
    %c0_2 = arith.constant 0 : index
    %1 = vector.load %arg1[%c0_1, %c0_2] : memref<256x16xf32, #tpu.memory_space<vmem>>, vector<256x16xf32>
    %cst = arith.constant dense<0.000000e+00> : vector<128x256xf32>
    %2 = tpu.matmul %0, %1, %cst {dimension_numbers = #tpu.dot_dimension_numbers<[1], [1], [0], [0], [0, 0, 1, 0], [], []>} : vector<128x16xf32>, vector<256x16xf32>, vector<128x256xf32> -> vector<128x256xf32>
    %c0_3 = arith.constant 0 : index
    %c0_4 = arith.constant 0 : index
    %3 = vector.load %arg3[%c0_3, %c0_4] : memref<128x1xf32, #tpu.memory_space<vmem>>, vector<128x1xf32>
    %4 = vector.broadcast %3 : vector<128x1xf32> to vector<128x256xf32>
    %5 = arith.addf %2, %4 : vector<128x256xf32>
    %cst_5 = arith.constant 2.000000e+01 : f32
    %6 = vector.broadcast %cst_5 : f32 to vector<128x256xf32>
    %7 = arith.minimumf %5, %6 : vector<128x256xf32>
    %8 = math.exp %7 : vector<128x256xf32>
    %9 = math.log1p %8 : vector<128x256xf32>
    %cst_6 = arith.constant 2.000000e+01 : f32
    %10 = vector.broadcast %cst_6 : f32 to vector<128x256xf32>
    %11 = arith.cmpf ogt, %5, %10 : vector<128x256xf32>
    %12 = arith.select %11, %5, %9 : vector<128x256xi1>, vector<128x256xf32>
    %c0_7 = arith.constant 0 : index
    %c0_8 = arith.constant 0 : index
    %13 = vector.load %arg4[%c0_7, %c0_8] : memref<128x128xf32, #tpu.memory_space<vmem>>, vector<128x128xf32>
    %cst_9 = arith.constant dense<0.000000e+00> : vector<128x256xf32>
    %14 = tpu.matmul %13, %12, %cst_9 {dimension_numbers = #tpu.dot_dimension_numbers<[1], [0], [0], [1], [0, 0, 1, 1], [], []>} : vector<128x128xf32>, vector<128x256xf32>, vector<128x256xf32> -> vector<128x256xf32>
    %c0_10 = arith.constant 0 : index
    %c0_11 = arith.constant 0 : index
    %15 = vector.load %arg5[%c0_10, %c0_11] : memref<128x1xf32, #tpu.memory_space<vmem>>, vector<128x1xf32>
    %16 = vector.broadcast %15 : vector<128x1xf32> to vector<128x256xf32>
    %17 = arith.addf %14, %16 : vector<128x256xf32>
    %cst_12 = arith.constant 2.000000e+01 : f32
    %18 = vector.broadcast %cst_12 : f32 to vector<128x256xf32>
    %19 = arith.minimumf %17, %18 : vector<128x256xf32>
    %20 = math.exp %19 : vector<128x256xf32>
    %21 = math.log1p %20 : vector<128x256xf32>
    %cst_13 = arith.constant 2.000000e+01 : f32
    %22 = vector.broadcast %cst_13 : f32 to vector<128x256xf32>
    %23 = arith.cmpf ogt, %17, %22 : vector<128x256xf32>
    %24 = arith.select %23, %17, %21 : vector<128x256xi1>, vector<128x256xf32>
    %c0_14 = arith.constant 0 : index
    %c0_15 = arith.constant 0 : index
    %25 = vector.load %arg6[%c0_14, %c0_15] : memref<64x128xf32, #tpu.memory_space<vmem>>, vector<64x128xf32>
    %cst_16 = arith.constant dense<0.000000e+00> : vector<64x256xf32>
    %26 = tpu.matmul %25, %24, %cst_16 {dimension_numbers = #tpu.dot_dimension_numbers<[1], [0], [0], [1], [0, 0, 1, 1], [], []>} : vector<64x128xf32>, vector<128x256xf32>, vector<64x256xf32> -> vector<64x256xf32>
    %c0_17 = arith.constant 0 : index
    %c0_18 = arith.constant 0 : index
    %27 = vector.load %arg7[%c0_17, %c0_18] : memref<64x1xf32, #tpu.memory_space<vmem>>, vector<64x1xf32>
    %28 = vector.broadcast %27 : vector<64x1xf32> to vector<64x256xf32>
    %29 = arith.addf %26, %28 : vector<64x256xf32>
    %cst_19 = arith.constant 2.000000e+01 : f32
    %30 = vector.broadcast %cst_19 : f32 to vector<64x256xf32>
    %31 = arith.minimumf %29, %30 : vector<64x256xf32>
    %32 = math.exp %31 : vector<64x256xf32>
    %33 = math.log1p %32 : vector<64x256xf32>
    %cst_20 = arith.constant 2.000000e+01 : f32
    %34 = vector.broadcast %cst_20 : f32 to vector<64x256xf32>
    %35 = arith.cmpf ogt, %29, %34 : vector<64x256xf32>
    %36 = arith.select %35, %29, %33 : vector<64x256xi1>, vector<64x256xf32>
    %c0_21 = arith.constant 0 : index
    %c0_22 = arith.constant 0 : index
    %37 = vector.load %arg8[%c0_21, %c0_22] : memref<64x64xf32, #tpu.memory_space<vmem>>, vector<64x64xf32>
    %cst_23 = arith.constant dense<0.000000e+00> : vector<64x256xf32>
    %38 = tpu.matmul %37, %36, %cst_23 {dimension_numbers = #tpu.dot_dimension_numbers<[1], [0], [0], [1], [0, 0, 1, 1], [], []>} : vector<64x64xf32>, vector<64x256xf32>, vector<64x256xf32> -> vector<64x256xf32>
    %c0_24 = arith.constant 0 : index
    %c0_25 = arith.constant 0 : index
    %39 = vector.load %arg9[%c0_24, %c0_25] : memref<64x1xf32, #tpu.memory_space<vmem>>, vector<64x1xf32>
    %40 = vector.broadcast %39 : vector<64x1xf32> to vector<64x256xf32>
    %41 = arith.addf %38, %40 : vector<64x256xf32>
    %cst_26 = arith.constant 2.000000e+01 : f32
    %42 = vector.broadcast %cst_26 : f32 to vector<64x256xf32>
    %43 = arith.minimumf %41, %42 : vector<64x256xf32>
    %44 = math.exp %43 : vector<64x256xf32>
    %45 = math.log1p %44 : vector<64x256xf32>
    %cst_27 = arith.constant 2.000000e+01 : f32
    %46 = vector.broadcast %cst_27 : f32 to vector<64x256xf32>
    %47 = arith.cmpf ogt, %41, %46 : vector<64x256xf32>
    %48 = arith.select %47, %41, %45 : vector<64x256xi1>, vector<64x256xf32>
    %49 = arith.mulf %48, %48 : vector<64x256xf32>
    %cst_28 = arith.constant dense<0.000000e+00> : vector<256xf32>
    %50 = vector.multi_reduction <add>, %49, %cst_28 [0] : vector<64x256xf32> to vector<256xf32>
    %51 = vector.shape_cast %50 : vector<256xf32> to vector<1x256xf32>
    %c0_29 = arith.constant 0 : index
    %c0_30 = arith.constant 0 : index
    %52 = vector.load %arg10[%c0_29, %c0_30] : memref<1x256xf32, #tpu.memory_space<vmem>>, vector<1x256xf32>
    tpu.vector_store %arg10[%c0_29, %c0_30], %51 {strides = array<i32>} : memref<1x256xf32, #tpu.memory_space<vmem>>, vector<1x256xf32>,
    return
  }
  func.func @transform_0(%arg0: i32) -> (i32, i32) {
    %c0_i32 = arith.constant 0 : i32
    %c0_i32_0 = arith.constant 0 : i32
    return %arg0, %c0_i32 : i32, i32
  }
  func.func @transform_1(%arg0: i32) -> (i32, i32) {
    %c0_i32 = arith.constant 0 : i32
    %c0_i32_0 = arith.constant 0 : i32
    %c0_i32_1 = arith.constant 0 : i32
    return %c0_i32, %c0_i32_0 : i32, i32
  }
  func.func @transform_2(%arg0: i32) -> (i32, i32) {
    %c0_i32 = arith.constant 0 : i32
    %c0_i32_0 = arith.constant 0 : i32
    %c0_i32_1 = arith.constant 0 : i32
    return %c0_i32, %c0_i32_0 : i32, i32
  }
  func.func @transform_3(%arg0: i32) -> (i32, i32) {
    %c0_i32 = arith.constant 0 : i32
    %c0_i32_0 = arith.constant 0 : i32
    %c0_i32_1 = arith.constant 0 : i32
    return %c0_i32, %c0_i32_0 : i32, i32
  }
  func.func @transform_4(%arg0: i32) -> (i32, i32) {
    %c0_i32 = arith.constant 0 : i32
    %c0_i32_0 = arith.constant 0 : i32
    %c0_i32_1 = arith.constant 0 : i32
    return %c0_i32, %c0_i32_0 : i32, i32
  }
  func.func @transform_5(%arg0: i32) -> (i32, i32) {
    %c0_i32 = arith.constant 0 : i32
    %c0_i32_0 = arith.constant 0 : i32
    %c0_i32_1 = arith.constant 0 : i32
    return %c0_i32, %c0_i32_0 : i32, i32
  }
  func.func @transform_6(%arg0: i32) -> (i32, i32) {
    %c0_i32 = arith.constant 0 : i32
    %c0_i32_0 = arith.constant 0 : i32
    %c0_i32_1 = arith.constant 0 : i32
    return %c0_i32, %c0_i32_0 : i32, i32
  }
  func.func @transform_7(%arg0: i32) -> (i32, i32) {
    %c0_i32 = arith.constant 0 : i32
    %c0_i32_0 = arith.constant 0 : i32
    %c0_i32_1 = arith.constant 0 : i32
    return %c0_i32, %c0_i32_0 : i32, i32
  }
  func.func @transform_8(%arg0: i32) -> (i32, i32) {
    %c0_i32 = arith.constant 0 : i32
    %c0_i32_0 = arith.constant 0 : i32
    %c0_i32_1 = arith.constant 0 : i32
    return %c0_i32, %c0_i32_0 : i32, i32
  }
  func.func @transform_9(%arg0: i32) -> (i32, i32) {
    %c0_i32 = arith.constant 0 : i32
    %c0_i32_0 = arith.constant 0 : i32
    return %c0_i32, %arg0 : i32, i32
  }
}

</mosaic_0001>

<llo_original>
// kernel: tpu_custom_call.1
$region0: #{tpu_custom_call.1}
  #allocation0 [shape = 'u32[]', space=smem, size = 0x4, offset = 0x4, fixed_abs, tag = 'smem constant byte address 0x4 - core index']
  #allocation1 [shape = 'u32[144,128]{1,0:T(1,128)}', space=vmem, size = 0x12000, scoped, tag = 'internal scratch']
  %s0 = inlined_call_operand.vmem [shape: f32[256,16], index: 0, kind: input, shape index: {}]
  %s1 = inlined_call_operand.vmem [shape: f32[128,16], index: 1, kind: input, shape index: {}]
  %s2 = inlined_call_operand.vmem [shape: f32[128,1], index: 2, kind: input, shape index: {}]
  %s3 = inlined_call_operand.vmem [shape: f32[128,128], index: 3, kind: input, shape index: {}]
  %s4 = inlined_call_operand.vmem [shape: f32[128,1], index: 4, kind: input, shape index: {}]
  %s5 = inlined_call_operand.vmem [shape: f32[64,128], index: 5, kind: input, shape index: {}]
  %s6 = inlined_call_operand.vmem [shape: f32[64,1], index: 6, kind: input, shape index: {}]
  %s7 = inlined_call_operand.vmem [shape: f32[64,64], index: 7, kind: input, shape index: {}]
  %s8 = inlined_call_operand.vmem [shape: f32[64,1], index: 8, kind: input, shape index: {}]
  %s9 = inlined_call_operand.hbm [shape: f32[1,256], index: 9, kind: output, shape index: {}]
  %s10 = sld [smem:[#allocation0]]
  $region46: #{tpu_custom_call.1} parent=0
    _
  %s12 = ssub.s32 1, %s10
  %s13 = scalar_select 0, %s12, %s10
  $region1: #{tpu_custom_call.1} parent=0
    #allocation2 [shape = 'u8[1024]{0}', space=vmem, size = 0x400, scoped, tag = 'output window, operand 0, single buffered']
    #allocation3 [shape = 's32[1]{0}', space=sflag, size = 0x4, scoped, tag = 'scoped memory for tpu_custom_call.1']
    %14 = vsyncpa [#allocation3], 0
    // Predicated region
    $region2: #{tpu_custom_call.1} parent=1 // pred_check
      _
    $region3: #{tpu_custom_call.1} parent=1 // pred_check_branch
      %16 = sbr.rel (0) target = $region5
    $region4: #{tpu_custom_call.1} parent=1 // pred_region
      _
    $region5: #{tpu_custom_call.1} parent=1 // pred_fallthru
      _
    // Predicated region
    $region6: #{tpu_custom_call.1} parent=1 // pred_check
      _
    $region7: #{tpu_custom_call.1} parent=1 // pred_check_branch
      %18 = sbr.rel (0) target = $region9
    $region8: #{tpu_custom_call.1} parent=1 // pred_region
      _
    $region9: #{tpu_custom_call.1} parent=1 // pred_fallthru
      _
    // Predicated region
    $region10: #{tpu_custom_call.1} parent=1 // pred_check
      _
    $region11: #{tpu_custom_call.1} parent=1 // pred_check_branch
      %20 = sbr.rel (0) target = $region13
    $region12: #{tpu_custom_call.1} parent=1 // pred_region
      _
    $region13: #{tpu_custom_call.1} parent=1 // pred_fallthru
      _
    // Predicated region
    $region14: #{tpu_custom_call.1} parent=1 // pred_check
      _
    $region15: #{tpu_custom_call.1} parent=1 // pred_check_branch
      %22 = sbr.rel (0) target = $region17
    $region16: #{tpu_custom_call.1} parent=1 // pred_region
      _
    $region17: #{tpu_custom_call.1} parent=1 // pred_fallthru
      _
    // Predicated region
    $region18: #{tpu_custom_call.1} parent=1 // pred_check
      _
    $region19: #{tpu_custom_call.1} parent=1 // pred_check_branch
      %24 = sbr.rel (0) target = $region21
    $region20: #{tpu_custom_call.1} parent=1 // pred_region
      _
    $region21: #{tpu_custom_call.1} parent=1 // pred_fallthru
      _
    // Predicated region
    $region22: #{tpu_custom_call.1} parent=1 // pred_check
      _
    $region23: #{tpu_custom_call.1} parent=1 // pred_check_branch
      %26 = sbr.rel (0) target = $region25
    $region24: #{tpu_custom_call.1} parent=1 // pred_region
      _
    $region25: #{tpu_custom_call.1} parent=1 // pred_fallthru
      _
    // Predicated region
    $region26: #{tpu_custom_call.1} parent=1 // pred_check
      _
    $region27: #{tpu_custom_call.1} parent=1 // pred_check_branch
      %28 = sbr.rel (0) target = $region29
    $region28: #{tpu_custom_call.1} parent=1 // pred_region
      _
    $region29: #{tpu_custom_call.1} parent=1 // pred_fallthru
      _
    // Predicated region
    $region30: #{tpu_custom_call.1} parent=1 // pred_check
      _
    $region31: #{tpu_custom_call.1} parent=1 // pred_check_branch
      %30 = sbr.rel (0) target = $region33
    $region32: #{tpu_custom_call.1} parent=1 // pred_region
      _
    $region33: #{tpu_custom_call.1} parent=1 // pred_fallthru
      _
    // Predicated region
    $region34: #{tpu_custom_call.1} parent=1 // pred_check
      _
    $region35: #{tpu_custom_call.1} parent=1 // pred_check_branch
      %32 = sbr.rel (0) target = $region37
    $region36: #{tpu_custom_call.1} parent=1 // pred_region
      _
    $region37: #{tpu_custom_call.1} parent=1 // pred_fallthru
      _
    %v33 = vld [vmem:[%s1] sm:$0xff]
    %v34 = vld [vmem:[%s1 + $0x8] sm:$0xff]
    %v35 = vld [vmem:[%s1 + $0x10] sm:$0xff]
    %v36 = vld [vmem:[%s1 + $0x18] sm:$0xff]
    %v37 = vld [vmem:[%s1 + $0x20] sm:$0xff]
    %v38 = vld [vmem:[%s1 + $0x28] sm:$0xff]
    %v39 = vld [vmem:[%s1 + $0x30] sm:$0xff]
    %v40 = vld [vmem:[%s1 + $0x38] sm:$0xff]
    %v41 = vld [vmem:[%s1 + $0x40] sm:$0xff]
    %v42 = vld [vmem:[%s1 + $0x48] sm:$0xff]
    %v43 = vld [vmem:[%s1 + $0x50] sm:$0xff]
    %v44 = vld [vmem:[%s1 + $0x58] sm:$0xff]
    %v45 = vld [vmem:[%s1 + $0x60] sm:$0xff]
    %v46 = vld [vmem:[%s1 + $0x68] sm:$0xff]
    %v47 = vld [vmem:[%s1 + $0x70] sm:$0xff]
    %v48 = vld [vmem:[%s1 + $0x78] sm:$0xff]
    %v49 = vld [vmem:[%s0] sm:$0xff]
    %v50 = vld [vmem:[%s0 + $0x8] sm:$0xff]
    %v51 = vld [vmem:[%s0 + $0x10] sm:$0xff]
    %v52 = vld [vmem:[%s0 + $0x18] sm:$0xff]
    %v53 = vld [vmem:[%s0 + $0x20] sm:$0xff]
    %v54 = vld [vmem:[%s0 + $0x28] sm:$0xff]
    %v55 = vld [vmem:[%s0 + $0x30] sm:$0xff]
    %v56 = vld [vmem:[%s0 + $0x38] sm:$0xff]
    %v57 = vld [vmem:[%s0 + $0x40] sm:$0xff]
    %v58 = vld [vmem:[%s0 + $0x48] sm:$0xff]
    %v59 = vld [vmem:[%s0 + $0x50] sm:$0xff]
    %v60 = vld [vmem:[%s0 + $0x58] sm:$0xff]
    %v61 = vld [vmem:[%s0 + $0x60] sm:$0xff]
    %v62 = vld [vmem:[%s0 + $0x68] sm:$0xff]
    %v63 = vld [vmem:[%s0 + $0x70] sm:$0xff]
    %v64 = vld [vmem:[%s0 + $0x78] sm:$0xff]
    %v65 = vld [vmem:[%s0 + $0x80] sm:$0xff]
    %v66 = vld [vmem:[%s0 + $0x88] sm:$0xff]
    %v67 = vld [vmem:[%s0 + $0x90] sm:$0xff]
    %v68 = vld [vmem:[%s0 + $0x98] sm:$0xff]
    %v69 = vld [vmem:[%s0 + $0xa0] sm:$0xff]
    %v70 = vld [vmem:[%s0 + $0xa8] sm:$0xff]
    %v71 = vld [vmem:[%s0 + $0xb0] sm:$0xff]
    %v72 = vld [vmem:[%s0 + $0xb8] sm:$0xff]
    %v73 = vld [vmem:[%s0 + $0xc0] sm:$0xff]
    %v74 = vld [vmem:[%s0 + $0xc8] sm:$0xff]
    %v75 = vld [vmem:[%s0 + $0xd0] sm:$0xff]
    %v76 = vld [vmem:[%s0 + $0xd8] sm:$0xff]
    %v77 = vld [vmem:[%s0 + $0xe0] sm:$0xff]
    %v78 = vld [vmem:[%s0 + $0xe8] sm:$0xff]
    %v79 = vld [vmem:[%s0 + $0xf0] sm:$0xff]
    %v80 = vld [vmem:[%s0 + $0xf8] sm:$0xff]
    %v81 = vld [vmem:[%s2] sm:$0xff]
    %v82 = vld [vmem:[%s2 + $0x8] sm:$0xff]
    %v83 = vld [vmem:[%s2 + $0x10] sm:$0xff]
    %v84 = vld [vmem:[%s2 + $0x18] sm:$0xff]
    %v85 = vld [vmem:[%s2 + $0x20] sm:$0xff]
    %v86 = vld [vmem:[%s2 + $0x28] sm:$0xff]
    %v87 = vld [vmem:[%s2 + $0x30] sm:$0xff]
    %v88 = vld [vmem:[%s2 + $0x38] sm:$0xff]
    %v89 = vld [vmem:[%s2 + $0x40] sm:$0xff]
    %v90 = vld [vmem:[%s2 + $0x48] sm:$0xff]
    %v91 = vld [vmem:[%s2 + $0x50] sm:$0xff]
    %v92 = vld [vmem:[%s2 + $0x58] sm:$0xff]
    %v93 = vld [vmem:[%s2 + $0x60] sm:$0xff]
    %v94 = vld [vmem:[%s2 + $0x68] sm:$0xff]
    %v95 = vld [vmem:[%s2 + $0x70] sm:$0xff]
    %v96 = vld [vmem:[%s2 + $0x78] sm:$0xff]
    %98 = vset.pattern.permute.xlu0 0
    %99 = vperm.xlu0 %98, %v81
    %v100 = vpop.permute.xlu0 %99
    %103 = vset.pattern.permute.xlu0 0
    %104 = vperm.xlu0 %103, %v82
    %v105 = vpop.permute.xlu0 %104
    %108 = vset.pattern.permute.xlu0 0
    %109 = vperm.xlu0 %108, %v83
    %v110 = vpop.permute.xlu0 %109
    %113 = vset.pattern.permute.xlu0 0
    %114 = vperm.xlu0 %113, %v84
    %v115 = vpop.permute.xlu0 %114
    %118 = vset.pattern.permute.xlu0 0
    %119 = vperm.xlu0 %118, %v85
    %v120 = vpop.permute.xlu0 %119
    %123 = vset.pattern.permute.xlu0 0
    %124 = vperm.xlu0 %123, %v86
    %v125 = vpop.permute.xlu0 %124
    %128 = vset.pattern.permute.xlu0 0
    %129 = vperm.xlu0 %128, %v87
    %v130 = vpop.permute.xlu0 %129
    %133 = vset.pattern.permute.xlu0 0
    %134 = vperm.xlu0 %133, %v88
    %v135 = vpop.permute.xlu0 %134
    %138 = vset.pattern.permute.xlu0 0
    %139 = vperm.xlu0 %138, %v89
    %v140 = vpop.permute.xlu0 %139
    %143 = vset.pattern.permute.xlu0 0
    %144 = vperm.xlu0 %143, %v90
    %v145 = vpop.permute.xlu0 %144
    %148 = vset.pattern.permute.xlu0 0
    %149 = vperm.xlu0 %148, %v91
    %v150 = vpop.permute.xlu0 %149
    %153 = vset.pattern.permute.xlu0 0
    %154 = vperm.xlu0 %153, %v92
    %v155 = vpop.permute.xlu0 %154
    %158 = vset.pattern.permute.xlu0 0
    %159 = vperm.xlu0 %158, %v93
    %v160 = vpop.permute.xlu0 %159
    %163 = vset.pattern.permute.xlu0 0
    %164 = vperm.xlu0 %163, %v94
    %v165 = vpop.permute.xlu0 %164
    %168 = vset.pattern.permute.xlu0 0
    %169 = vperm.xlu0 %168, %v95
    %v170 = vpop.permute.xlu0 %169
    %173 = vset.pattern.permute.xlu0 0
    %174 = vperm.xlu0 %173, %v96
    %v175 = vpop.permute.xlu0 %174
    %vm177 = vcmask 130048
    %v179 = vsel %vm177, %v33, 0
    %v182 = vsel %vm177, %v34, 0
    %v185 = vsel %vm177, %v35, 0
    %v188 = vsel %vm177, %v36, 0
    %v191 = vsel %vm177, %v37, 0
    %v194 = vsel %vm177, %v38, 0
    %v197 = vsel %vm177, %v39, 0
    %v200 = vsel %vm177, %v40, 0
    %v203 = vsel %vm177, %v41, 0
    %v206 = vsel %vm177, %v42, 0
    %v209 = vsel %vm177, %v43, 0
    %v212 = vsel %vm177, %v44, 0
    %v215 = vsel %vm177, %v45, 0
    %v218 = vsel %vm177, %v46, 0
    %v221 = vsel %vm177, %v47, 0
    %v224 = vsel %vm177, %v48, 0
    %v227 = vsel %vm177, %v49, 0
    %v230 = vsel %vm177, %v50, 0
    %v233 = vsel %vm177, %v51, 0
    %v236 = vsel %vm177, %v52, 0
    %v239 = vsel %vm177, %v53, 0
    %v242 = vsel %vm177, %v54, 0
    %v245 = vsel %vm177, %v55, 0
    %v248 = vsel %vm177, %v56, 0
    %v251 = vsel %vm177, %v57, 0
    %v254 = vsel %vm177, %v58, 0
    %v257 = vsel %vm177, %v59, 0
    %v260 = vsel %vm177, %v60, 0
    %v263 = vsel %vm177, %v61, 0
    %v266 = vsel %vm177, %v62, 0
    %v269 = vsel %vm177, %v63, 0
    %v272 = vsel %vm177, %v64, 0
    %v275 = vsel %vm177, %v65, 0
    %v278 = vsel %vm177, %v66, 0
    %v281 = vsel %vm177, %v67, 0
    %v284 = vsel %vm177, %v68, 0
    %v287 = vsel %vm177, %v69, 0
    %v290 = vsel %vm177, %v70, 0
    %v293 = vsel %vm177, %v71, 0
    %v296 = vsel %vm177, %v72, 0
    %v299 = vsel %vm177, %v73, 0
    %v302 = vsel %vm177, %v74, 0
    %v305 = vsel %vm177, %v75, 0
    %v308 = vsel %vm177, %v76, 0
    %v311 = vsel %vm177, %v77, 0
    %v314 = vsel %vm177, %v78, 0
    %v317 = vsel %vm177, %v79, 0
    %v320 = vsel %vm177, %v80, 0
    %322 = vmatprep.subr.mxu0 0.0
    %323 = vmatpush1.xpose.msra.mxu0 %v227
    %324 = vmatprep.subr.mxu0 0.0
    %325 = vmatpush1.xpose.msra.mxu0 %v230
    %326 = vmatprep.subr.mxu0 0.0
    %327 = vmatpush1.xpose.msra.mxu0 %v233
    %328 = vmatprep.subr.mxu0 0.0
    %329 = vmatpush1.xpose.msra.mxu0 %v236
    %330 = vmatprep.subr.mxu0 0.0
    %331 = vmatpush1.xpose.msra.mxu0 %v239
    %332 = vmatprep.subr.mxu0 0.0
    %333 = vmatpush1.xpose.msra.mxu0 %v242
    %334 = vmatprep.subr.mxu0 0.0
    %335 = vmatpush1.xpose.msra.mxu0 %v245
    %336 = vmatprep.subr.mxu0 0.0
    %337 = vmatpush1.xpose.msra.mxu0 %v248
    %338 = vmatprep.subr.mxu0 0.0
    %339 = vmatpush1.xpose.msra.mxu0 %v251
    %340 = vmatprep.subr.mxu0 0.0
    %341 = vmatpush1.xpose.msra.mxu0 %v254
    %342 = vmatprep.subr.mxu0 0.0
    %343 = vmatpush1.xpose.msra.mxu0 %v257
    %344 = vmatprep.subr.mxu0 0.0
    %345 = vmatpush1.xpose.msra.mxu0 %v260
    %346 = vmatprep.subr.mxu0 0.0
    %347 = vmatpush1.xpose.msra.mxu0 %v263
    %348 = vmatprep.subr.mxu0 0.0
    %349 = vmatpush1.xpose.msra.mxu0 %v266
    %350 = vmatprep.subr.mxu0 0.0
    %351 = vmatpush1.xpose.msra.mxu0 %v269
    %352 = vmatprep.subr.mxu0 0.0
    %353 = vmatpush1.xpose.msra.mxu0 %v272
    %354 = vmatprep.subr.mxu0 0.0
    %355 = vmatpush1.xpose.msra.mxu0 %v275
    %356 = vmatprep.subr.mxu0 0.0
    %357 = vmatpush1.xpose.msra.mxu0 %v278
    %358 = vmatprep.subr.mxu0 0.0
    %359 = vmatpush1.xpose.msra.mxu0 %v281
    %360 = vmatprep.subr.mxu0 0.0
    %361 = vmatpush1.xpose.msra.mxu0 %v284
    %362 = vmatprep.subr.mxu0 0.0
    %363 = vmatpush1.xpose.msra.mxu0 %v287
    %364 = vmatprep.subr.mxu0 0.0
    %365 = vmatpush1.xpose.msra.mxu0 %v290
    %366 = vmatprep.subr.mxu0 0.0
    %367 = vmatpush1.xpose.msra.mxu0 %v293
    %368 = vmatprep.subr.mxu0 0.0
    %369 = vmatpush1.xpose.msra.mxu0 %v296
    %370 = vmatprep.subr.mxu0 0.0
    %371 = vmatpush1.xpose.msra.mxu0 %v299
    %372 = vmatprep.subr.mxu0 0.0
    %373 = vmatpush1.xpose.msra.mxu0 %v302
    %374 = vmatprep.subr.mxu0 0.0
    %375 = vmatpush1.xpose.msra.mxu0 %v305
    %376 = vmatprep.subr.mxu0 0.0
    %377 = vmatpush1.xpose.msra.mxu0 %v308
    %378 = vmatprep.subr.mxu0 0.0
    %379 = vmatpush1.xpose.msra.mxu0 %v311
    %380 = vmatprep.subr.mxu0 0.0
    %381 = vmatpush1.xpose.msra.mxu0 %v314
    %382 = vmatprep.subr.mxu0 0.0
    %383 = vmatpush1.xpose.msra.mxu0 %v317
    %384 = vmatprep.subr.mxu0 0.0
    %385 = vmatpush1.xpose.msra.mxu0 %v320
    %386 = vmatprep.mubr.f32.mxu0 0.0
    %387 = vmatmul.mubr.f32.gmra.mrb[0].mxu0 %v179
    %v388 = vpop.f32.mrb[0].mxu0
    %v389 = vadd.f32 %v100, %v388
    %v390 = vpop.f32.mrb[0].mxu0
    %v391 = vadd.f32 %v100, %v390
    %392 = vmatprep.mubr.f32.mxu0 0.0
    %393 = vmatmul.mubr.f32.gmra.mrb[0].mxu0 %v182
    %v394 = vpop.f32.mrb[0].mxu0
    %v395 = vadd.f32 %v105, %v394
    %v396 = vpop.f32.mrb[0].mxu0
    %v397 = vadd.f32 %v105, %v396
    %398 = vmatprep.mubr.f32.mxu0 0.0
    %399 = vmatmul.mubr.f32.gmra.mrb[0].mxu0 %v185
    %v400 = vpop.f32.mrb[0].mxu0
    %v401 = vadd.f32 %v110, %v400
    %v402 = vpop.f32.mrb[0].mxu0
    %v403 = vadd.f32 %v110, %v402
    %404 = vmatprep.mubr.f32.mxu0 0.0
    %405 = vmatmul.mubr.f32.gmra.mrb[0].mxu0 %v188
    %v406 = vpop.f32.mrb[0].mxu0
    %v407 = vadd.f32 %v115, %v406
    %v408 = vpop.f32.mrb[0].mxu0
    %v409 = vadd.f32 %v115, %v408
    %410 = vmatprep.mubr.f32.mxu0 0.0
    %411 = vmatmul.mubr.f32.gmra.mrb[0].mxu0 %v191
    %v412 = vpop.f32.mrb[0].mxu0
    %v413 = vadd.f32 %v120, %v412
    %v414 = vpop.f32.mrb[0].mxu0
    %v415 = vadd.f32 %v120, %v414
    %416 = vmatprep.mubr.f32.mxu0 0.0
    %417 = vmatmul.mubr.f32.gmra.mrb[0].mxu0 %v194
    %v418 = vpop.f32.mrb[0].mxu0
    %v419 = vadd.f32 %v125, %v418
    %v420 = vpop.f32.mrb[0].mxu0
    %v421 = vadd.f32 %v125, %v420
    %422 = vmatprep.mubr.f32.mxu0 0.0
    %423 = vmatmul.mubr.f32.gmra.mrb[0].mxu0 %v197
    %v424 = vpop.f32.mrb[0].mxu0
    %v425 = vadd.f32 %v130, %v424
    %v426 = vpop.f32.mrb[0].mxu0
    %v427 = vadd.f32 %v130, %v426
    %428 = vmatprep.mubr.f32.mxu0 0.0
    %429 = vmatmul.mubr.f32.gmra.mrb[0].mxu0 %v200
    %v430 = vpop.f32.mrb[0].mxu0
    %v431 = vadd.f32 %v135, %v430
    %v432 = vpop.f32.mrb[0].mxu0
    %v433 = vadd.f32 %v135, %v432
    %434 = vmatprep.mubr.f32.mxu0 0.0
    %435 = vmatmul.mubr.f32.gmra.mrb[0].mxu0 %v203
    %v436 = vpop.f32.mrb[0].mxu0
    %v437 = vadd.f32 %v140, %v436
    %v438 = vpop.f32.mrb[0].mxu0
    %v439 = vadd.f32 %v140, %v438
    %440 = vmatprep.mubr.f32.mxu0 0.0
    %441 = vmatmul.mubr.f32.gmra.mrb[0].mxu0 %v206
    %v442 = vpop.f32.mrb[0].mxu0
    %v443 = vadd.f32 %v145, %v442
    %v444 = vpop.f32.mrb[0].mxu0
    %v445 = vadd.f32 %v145, %v444
    %446 = vmatprep.mubr.f32.mxu0 0.0
    %447 = vmatmul.mubr.f32.gmra.mrb[0].mxu0 %v209
    %v448 = vpop.f32.mrb[0].mxu0
    %v449 = vadd.f32 %v150, %v448
    %v450 = vpop.f32.mrb[0].mxu0
    %v451 = vadd.f32 %v150, %v450
    %452 = vmatprep.mubr.f32.mxu0 0.0
    %453 = vmatmul.mubr.f32.gmra.mrb[0].mxu0 %v212
    %v454 = vpop.f32.mrb[0].mxu0
    %v455 = vadd.f32 %v155, %v454
    %v456 = vpop.f32.mrb[0].mxu0
    %v457 = vadd.f32 %v155, %v456
    %458 = vmatprep.mubr.f32.mxu0 0.0
    %459 = vmatmul.mubr.f32.gmra.mrb[0].mxu0 %v215
    %v460 = vpop.f32.mrb[0].mxu0
    %v461 = vadd.f32 %v160, %v460
    %v462 = vpop.f32.mrb[0].mxu0
    %v463 = vadd.f32 %v160, %v462
    %464 = vmatprep.mubr.f32.mxu0 0.0
    %465 = vmatmul.mubr.f32.gmra.mrb[0].mxu0 %v218
    %v466 = vpop.f32.mrb[0].mxu0
    %v467 = vadd.f32 %v165, %v466
    %v468 = vpop.f32.mrb[0].mxu0
    %v469 = vadd.f32 %v165, %v468
    %470 = vmatprep.mubr.f32.mxu0 0.0
    %471 = vmatmul.mubr.f32.gmra.mrb[0].mxu0 %v221
    %v472 = vpop.f32.mrb[0].mxu0
    %v473 = vadd.f32 %v170, %v472
    %v474 = vpop.f32.mrb[0].mxu0
    %v475 = vadd.f32 %v170, %v474
    %476 = vmatprep.mubr.f32.mxu0 0.0
    %477 = vmatmul.mubr.f32.gmra.mrb[0].mxu0 %v224
    %v478 = vpop.f32.mrb[0].mxu0
    %v479 = vadd.f32 %v175, %v478
    %v480 = vpop.f32.mrb[0].mxu0
    %v481 = vadd.f32 %v175, %v480
    %482 = vdwg.mxu0
    %v483 = vmin.f32 %v389, 20.0
    %v484 = vmin.f32 %v391, 20.0
    %v485 = vmin.f32 %v395, 20.0
    %v486 = vmin.f32 %v397, 20.0
    %v487 = vmin.f32 %v401, 20.0
    %v488 = vmin.f32 %v403, 20.0
    %v489 = vmin.f32 %v407, 20.0
    %v490 = vmin.f32 %v409, 20.0
    %v491 = vmin.f32 %v413, 20.0
    %v492 = vmin.f32 %v415, 20.0
    %v493 = vmin.f32 %v419, 20.0
    %v494 = vmin.f32 %v421, 20.0
    %v495 = vmin.f32 %v425, 20.0
    %v496 = vmin.f32 %v427, 20.0
    %v497 = vmin.f32 %v431, 20.0
    %v498 = vmin.f32 %v433, 20.0
    %v499 = vmin.f32 %v437, 20.0
    %v500 = vmin.f32 %v439, 20.0
    %v501 = vmin.f32 %v443, 20.0
    %v502 = vmin.f32 %v445, 20.0
    %v503 = vmin.f32 %v449, 20.0
    %v504 = vmin.f32 %v451, 20.0
    %v505 = vmin.f32 %v455, 20.0
    %v506 = vmin.f32 %v457, 20.0
    %v507 = vmin.f32 %v461, 20.0
    %v508 = vmin.f32 %v463, 20.0
    %v509 = vmin.f32 %v467, 20.0
    %v510 = vmin.f32 %v469, 20.0
    %v511 = vmin.f32 %v473, 20.0
    %v512 = vmin.f32 %v475, 20.0
    %v513 = vmin.f32 %v479, 20.0
    %v514 = vmin.f32 %v481, 20.0
    %v515 = vmul.f32 %v483, 1.442695
    %v516 = vpow.pop %v515
    %v517 = vmul.f32 %v484, 1.442695
    %v518 = vpow.pop %v517
    %v519 = vmul.f32 %v485, 1.442695
    %v520 = vpow.pop %v519
    %v521 = vmul.f32 %v486, 1.442695
    %v522 = vpow.pop %v521
    %v523 = vmul.f32 %v487, 1.442695
    %v524 = vpow.pop %v523
    %v525 = vmul.f32 %v488, 1.442695
    %v526 = vpow.pop %v525
    %v527 = vmul.f32 %v489, 1.442695
    %v528 = vpow.pop %v527
    %v529 = vmul.f32 %v490, 1.442695
    %v530 = vpow.pop %v529
    %v531 = vmul.f32 %v491, 1.442695
    %v532 = vpow.pop %v531
    %v533 = vmul.f32 %v492, 1.442695
    %v534 = vpow.pop %v533
    %v535 = vmul.f32 %v493, 1.442695
    %v536 = vpow.pop %v535
    %v537 = vmul.f32 %v494, 1.442695
    %v538 = vpow.pop %v537
    %v539 = vmul.f32 %v495, 1.442695
    %v540 = vpow.pop %v539
    %v541 = vmul.f32 %v496, 1.442695
    %v542 = vpow.pop %v541
    %v543 = vmul.f32 %v497, 1.442695
    %v544 = vpow.pop %v543
    %v545 = vmul.f32 %v498, 1.442695
    %v546 = vpow.pop %v545
    %v547 = vmul.f32 %v499, 1.442695
    %v548 = vpow.pop %v547
    %v549 = vmul.f32 %v500, 1.442695
    %v550 = vpow.pop %v549
    %v551 = vmul.f32 %v501, 1.442695
    %v552 = vpow.pop %v551
    %v553 = vmul.f32 %v502, 1.442695
    %v554 = vpow.pop %v553
    %v555 = vmul.f32 %v503, 1.442695
    %v556 = vpow.pop %v555
    %v557 = vmul.f32 %v504, 1.442695
    %v558 = vpow.pop %v557
    %v559 = vmul.f32 %v505, 1.442695
    %v560 = vpow.pop %v559
    %v561 = vmul.f32 %v506, 1.442695
    %v562 = vpow.pop %v561
    %v563 = vmul.f32 %v507, 1.442695
    %v564 = vpow.pop %v563
    %v565 = vmul.f32 %v508, 1.442695
    %v566 = vpow.pop %v565
    %v567 = vmul.f32 %v509, 1.442695
    %v568 = vpow.pop %v567
    %v569 = vmul.f32 %v510, 1.442695
    %v570 = vpow.pop %v569
    %v571 = vmul.f32 %v511, 1.442695
    %v572 = vpow.pop %v571
    %v573 = vmul.f32 %v512, 1.442695
    %v574 = vpow.pop %v573
    %v575 = vmul.f32 %v513, 1.442695
    %v576 = vpow.pop %v575
    %v577 = vmul.f32 %v514, 1.442695
    %v578 = vpow.pop %v577
    %v579 = vadd.f32 %v516, 1.0
    %v580 = vlog2.pop %v579
    %v581 = vmul.f32 %v580, 0.6931472
    %v582 = vmul.f32 -0.5, %v516
    %v583 = vadd.f32 %v582, 1.0
    %v584 = vmul.f32 %v583, %v516
    %v585 = vand.u32 2147483647, %v516
    %vm586 = vcmp.lt.f32.partialorder %v585, 0.0004427343
    %v587 = vsel %vm586, %v584, %v581
    %v588 = vadd.f32 %v518, 1.0
    %v589 = vlog2.pop %v588
    %v590 = vmul.f32 %v589, 0.6931472
    %v591 = vmul.f32 -0.5, %v518
    %v592 = vadd.f32 %v591, 1.0
    %v593 = vmul.f32 %v592, %v518
    %v594 = vand.u32 2147483647, %v518
    %vm595 = vcmp.lt.f32.partialorder %v594, 0.0004427343
    %v596 = vsel %vm595, %v593, %v590
    %v597 = vadd.f32 %v520, 1.0
    %v598 = vlog2.pop %v597
    %v599 = vmul.f32 %v598, 0.6931472
    %v600 = vmul.f32 -0.5, %v520
    %v601 = vadd.f32 %v600, 1.0
    %v602 = vmul.f32 %v601, %v520
    %v603 = vand.u32 2147483647, %v520
    %vm604 = vcmp.lt.f32.partialorder %v603, 0.0004427343
    %v605 = vsel %vm604, %v602, %v599
    %v606 = vadd.f32 %v522, 1.0
    %v607 = vlog2.pop %v606
    %v608 = vmul.f32 %v607, 0.6931472
    %v609 = vmul.f32 -0.5, %v522
    %v610 = vadd.f32 %v609, 1.0
    %v611 = vmul.f32 %v610, %v522
    %v612 = vand.u32 2147483647, %v522
    %vm613 = vcmp.lt.f32.partialorder %v612, 0.0004427343
    %v614 = vsel %vm613, %v611, %v608
    %v615 = vadd.f32 %v524, 1.0
    %v616 = vlog2.pop %v615
    %v617 = vmul.f32 %v616, 0.6931472
    %v618 = vmul.f32 -0.5, %v524
    %v619 = vadd.f32 %v618, 1.0
    %v620 = vmul.f32 %v619, %v524
    %v621 = vand.u32 2147483647, %v524
    %vm622 = vcmp.lt.f32.partialorder %v621, 0.0004427343
    %v623 = vsel %vm622, %v620, %v617
    %v624 = vadd.f32 %v526, 1.0
    %v625 = vlog2.pop %v624
    %v626 = vmul.f32 %v625, 0.6931472
    %v627 = vmul.f32 -0.5, %v526
    %v628 = vadd.f32 %v627, 1.0
    %v629 = vmul.f32 %v628, %v526
    %v630 = vand.u32 2147483647, %v526
    %vm631 = vcmp.lt.f32.partialorder %v630, 0.0004427343
    %v632 = vsel %vm631, %v629, %v626
    %v633 = vadd.f32 %v528, 1.0
    %v634 = vlog2.pop %v633
    %v635 = vmul.f32 %v634, 0.6931472
    %v636 = vmul.f32 -0.5, %v528
    %v637 = vadd.f32 %v636, 1.0
    %v638 = vmul.f32 %v637, %v528
    %v639 = vand.u32 2147483647, %v528
    %vm640 = vcmp.lt.f32.partialorder %v639, 0.0004427343
    %v641 = vsel %vm640, %v638, %v635
    %v642 = vadd.f32 %v530, 1.0
    %v643 = vlog2.pop %v642
    %v644 = vmul.f32 %v643, 0.6931472
    %v645 = vmul.f32 -0.5, %v530
    %v646 = vadd.f32 %v645, 1.0
    %v647 = vmul.f32 %v646, %v530
    %v648 = vand.u32 2147483647, %v530
    %vm649 = vcmp.lt.f32.partialorder %v648, 0.0004427343
    %v650 = vsel %vm649, %v647, %v644
    %v651 = vadd.f32 %v532, 1.0
    %v652 = vlog2.pop %v651
    %v653 = vmul.f32 %v652, 0.6931472
    %v654 = vmul.f32 -0.5, %v532
    %v655 = vadd.f32 %v654, 1.0
    %v656 = vmul.f32 %v655, %v532
    %v657 = vand.u32 2147483647, %v532
    %vm658 = vcmp.lt.f32.partialorder %v657, 0.0004427343
    %v659 = vsel %vm658, %v656, %v653
    %v660 = vadd.f32 %v534, 1.0
    %v661 = vlog2.pop %v660
    %v662 = vmul.f32 %v661, 0.6931472
    %v663 = vmul.f32 -0.5, %v534
    %v664 = vadd.f32 %v663, 1.0
    %v665 = vmul.f32 %v664, %v534
    %v666 = vand.u32 2147483647, %v534
    %vm667 = vcmp.lt.f32.partialorder %v666, 0.0004427343
    %v668 = vsel %vm667, %v665, %v662
    %v669 = vadd.f32 %v536, 1.0
    %v670 = vlog2.pop %v669
    %v671 = vmul.f32 %v670, 0.6931472
    %v672 = vmul.f32 -0.5, %v536
    %v673 = vadd.f32 %v672, 1.0
    %v674 = vmul.f32 %v673, %v536
    %v675 = vand.u32 2147483647, %v536
    %vm676 = vcmp.lt.f32.partialorder %v675, 0.0004427343
    %v677 = vsel %vm676, %v674, %v671
    %v678 = vadd.f32 %v538, 1.0
    %v679 = vlog2.pop %v678
    %v680 = vmul.f32 %v679, 0.6931472
    %v681 = vmul.f32 -0.5, %v538
    %v682 = vadd.f32 %v681, 1.0
    %v683 = vmul.f32 %v682, %v538
    %v684 = vand.u32 2147483647, %v538
    %vm685 = vcmp.lt.f32.partialorder %v684, 0.0004427343
    %v686 = vsel %vm685, %v683, %v680
    %v687 = vadd.f32 %v540, 1.0
    %v688 = vlog2.pop %v687
    %v689 = vmul.f32 %v688, 0.6931472
    %v690 = vmul.f32 -0.5, %v540
    %v691 = vadd.f32 %v690, 1.0
    %v692 = vmul.f32 %v691, %v540
    %v693 = vand.u32 2147483647, %v540
    %vm694 = vcmp.lt.f32.partialorder %v693, 0.0004427343
    %v695 = vsel %vm694, %v692, %v689
    %v696 = vadd.f32 %v542, 1.0
    %v697 = vlog2.pop %v696
    %v698 = vmul.f32 %v697, 0.6931472
    %v699 = vmul.f32 -0.5, %v542
    %v700 = vadd.f32 %v699, 1.0
    %v701 = vmul.f32 %v700, %v542
    %v702 = vand.u32 2147483647, %v542
    %vm703 = vcmp.lt.f32.partialorder %v702, 0.0004427343
    %v704 = vsel %vm703, %v701, %v698
    %v705 = vadd.f32 %v544, 1.0
    %v706 = vlog2.pop %v705
    %v707 = vmul.f32 %v706, 0.6931472
    %v708 = vmul.f32 -0.5, %v544
    %v709 = vadd.f32 %v708, 1.0
    %v710 = vmul.f32 %v709, %v544
    %v711 = vand.u32 2147483647, %v544
    %vm712 = vcmp.lt.f32.partialorder %v711, 0.0004427343
    %v713 = vsel %vm712, %v710, %v707
    %v714 = vadd.f32 %v546, 1.0
    %v715 = vlog2.pop %v714
    %v716 = vmul.f32 %v715, 0.6931472
    %v717 = vmul.f32 -0.5, %v546
    %v718 = vadd.f32 %v717, 1.0
    %v719 = vmul.f32 %v718, %v546
    %v720 = vand.u32 2147483647, %v546
    %vm721 = vcmp.lt.f32.partialorder %v720, 0.0004427343
    %v722 = vsel %vm721, %v719, %v716
    %v723 = vadd.f32 %v548, 1.0
    %v724 = vlog2.pop %v723
    %v725 = vmul.f32 %v724, 0.6931472
    %v726 = vmul.f32 -0.5, %v548
    %v727 = vadd.f32 %v726, 1.0
    %v728 = vmul.f32 %v727, %v548
    %v729 = vand.u32 2147483647, %v548
    %vm730 = vcmp.lt.f32.partialorder %v729, 0.0004427343
    %v731 = vsel %vm730, %v728, %v725
    %v732 = vadd.f32 %v550, 1.0
    %v733 = vlog2.pop %v732
    %v734 = vmul.f32 %v733, 0.6931472
    %v735 = vmul.f32 -0.5, %v550
    %v736 = vadd.f32 %v735, 1.0
    %v737 = vmul.f32 %v736, %v550
    %v738 = vand.u32 2147483647, %v550
    %vm739 = vcmp.lt.f32.partialorder %v738, 0.0004427343
    %v740 = vsel %vm739, %v737, %v734
    %v741 = vadd.f32 %v552, 1.0
    %v742 = vlog2.pop %v741
    %v743 = vmul.f32 %v742, 0.6931472
    %v744 = vmul.f32 -0.5, %v552
    %v745 = vadd.f32 %v744, 1.0
    %v746 = vmul.f32 %v745, %v552
    %v747 = vand.u32 2147483647, %v552
    %vm748 = vcmp.lt.f32.partialorder %v747, 0.0004427343
    %v749 = vsel %vm748, %v746, %v743
    %v750 = vadd.f32 %v554, 1.0
    %v751 = vlog2.pop %v750
    %v752 = vmul.f32 %v751, 0.6931472
    %v753 = vmul.f32 -0.5, %v554
    %v754 = vadd.f32 %v753, 1.0
    %v755 = vmul.f32 %v754, %v554
    %v756 = vand.u32 2147483647, %v554
    %vm757 = vcmp.lt.f32.partialorder %v756, 0.0004427343
    %v758 = vsel %vm757, %v755, %v752
    %v759 = vadd.f32 %v556, 1.0
    %v760 = vlog2.pop %v759
    %v761 = vmul.f32 %v760, 0.6931472
    %v762 = vmul.f32 -0.5, %v556
    %v763 = vadd.f32 %v762, 1.0
    %v764 = vmul.f32 %v763, %v556
    %v765 = vand.u32 2147483647, %v556
    %vm766 = vcmp.lt.f32.partialorder %v765, 0.0004427343
    %v767 = vsel %vm766, %v764, %v761
    %v768 = vadd.f32 %v558, 1.0
    %v769 = vlog2.pop %v768
    %v770 = vmul.f32 %v769, 0.6931472
    %v771 = vmul.f32 -0.5, %v558
    %v772 = vadd.f32 %v771, 1.0
    %v773 = vmul.f32 %v772, %v558
    %v774 = vand.u32 2147483647, %v558
    %vm775 = vcmp.lt.f32.partialorder %v774, 0.0004427343
    %v776 = vsel %vm775, %v773, %v770
    %v777 = vadd.f32 %v560, 1.0
    %v778 = vlog2.pop %v777
    %v779 = vmul.f32 %v778, 0.6931472
    %v780 = vmul.f32 -0.5, %v560
    %v781 = vadd.f32 %v780, 1.0
    %v782 = vmul.f32 %v781, %v560
    %v783 = vand.u32 2147483647, %v560
    %vm784 = vcmp.lt.f32.partialorder %v783, 0.0004427343
    %v785 = vsel %vm784, %v782, %v779
    %v786 = vadd.f32 %v562, 1.0
    %v787 = vlog2.pop %v786
    %v788 = vmul.f32 %v787, 0.6931472
    %v789 = vmul.f32 -0.5, %v562
    %v790 = vadd.f32 %v789, 1.0
    %v791 = vmul.f32 %v790, %v562
    %v792 = vand.u32 2147483647, %v562
    %vm793 = vcmp.lt.f32.partialorder %v792, 0.0004427343
    %v794 = vsel %vm793, %v791, %v788
    %v795 = vadd.f32 %v564, 1.0
    %v796 = vlog2.pop %v795
    %v797 = vmul.f32 %v796, 0.6931472
    %v798 = vmul.f32 -0.5, %v564
    %v799 = vadd.f32 %v798, 1.0
    %v800 = vmul.f32 %v799, %v564
    %v801 = vand.u32 2147483647, %v564
    %vm802 = vcmp.lt.f32.partialorder %v801, 0.0004427343
    %v803 = vsel %vm802, %v800, %v797
    %v804 = vadd.f32 %v566, 1.0
    %v805 = vlog2.pop %v804
    %v806 = vmul.f32 %v805, 0.6931472
    %v807 = vmul.f32 -0.5, %v566
    %v808 = vadd.f32 %v807, 1.0
    %v809 = vmul.f32 %v808, %v566
    %v810 = vand.u32 2147483647, %v566
    %vm811 = vcmp.lt.f32.partialorder %v810, 0.0004427343
    %v812 = vsel %vm811, %v809, %v806
    %v813 = vadd.f32 %v568, 1.0
    %v814 = vlog2.pop %v813
    %v815 = vmul.f32 %v814, 0.6931472
    %v816 = vmul.f32 -0.5, %v568
    %v817 = vadd.f32 %v816, 1.0
    %v818 = vmul.f32 %v817, %v568
    %v819 = vand.u32 2147483647, %v568
    %vm820 = vcmp.lt.f32.partialorder %v819, 0.0004427343
    %v821 = vsel %vm820, %v818, %v815
    %v822 = vadd.f32 %v570, 1.0
    %v823 = vlog2.pop %v822
    %v824 = vmul.f32 %v823, 0.6931472
    %v825 = vmul.f32 -0.5, %v570
    %v826 = vadd.f32 %v825, 1.0
    %v827 = vmul.f32 %v826, %v570
    %v828 = vand.u32 2147483647, %v570
    %vm829 = vcmp.lt.f32.partialorder %v828, 0.0004427343
    %v830 = vsel %vm829, %v827, %v824
    %v831 = vadd.f32 %v572, 1.0
    %v832 = vlog2.pop %v831
    %v833 = vmul.f32 %v832, 0.6931472
    %v834 = vmul.f32 -0.5, %v572
    %v835 = vadd.f32 %v834, 1.0
    %v836 = vmul.f32 %v835, %v572
    %v837 = vand.u32 2147483647, %v572
    %vm838 = vcmp.lt.f32.partialorder %v837, 0.0004427343
    %v839 = vsel %vm838, %v836, %v833
    %v840 = vadd.f32 %v574, 1.0
    %v841 = vlog2.pop %v840
    %v842 = vmul.f32 %v841, 0.6931472
    %v843 = vmul.f32 -0.5, %v574
    %v844 = vadd.f32 %v843, 1.0
    %v845 = vmul.f32 %v844, %v574
    %v846 = vand.u32 2147483647, %v574
    %vm847 = vcmp.lt.f32.partialorder %v846, 0.0004427343
    %v848 = vsel %vm847, %v845, %v842
    %v849 = vadd.f32 %v576, 1.0
    %v850 = vlog2.pop %v849
    %v851 = vmul.f32 %v850, 0.6931472
    %v852 = vmul.f32 -0.5, %v576
    %v853 = vadd.f32 %v852, 1.0
    %v854 = vmul.f32 %v853, %v576
    %v855 = vand.u32 2147483647, %v576
    %vm856 = vcmp.lt.f32.partialorder %v855, 0.0004427343
    %v857 = vsel %vm856, %v854, %v851
    %v858 = vadd.f32 %v578, 1.0
    %v859 = vlog2.pop %v858
    %v860 = vmul.f32 %v859, 0.6931472
    %v861 = vmul.f32 -0.5, %v578
    %v862 = vadd.f32 %v861, 1.0
    %v863 = vmul.f32 %v862, %v578
    %v864 = vand.u32 2147483647, %v578
    %vm865 = vcmp.lt.f32.partialorder %v864, 0.0004427343
    %v866 = vsel %vm865, %v863, %v860
    %vm867 = vcmp.gt.f32.partialorder %v389, 20.0
    %vm868 = vcmp.gt.f32.partialorder %v391, 20.0
    %vm869 = vcmp.gt.f32.partialorder %v395, 20.0
    %vm870 = vcmp.gt.f32.partialorder %v397, 20.0
    %vm871 = vcmp.gt.f32.partialorder %v401, 20.0
    %vm872 = vcmp.gt.f32.partialorder %v403, 20.0
    %vm873 = vcmp.gt.f32.partialorder %v407, 20.0
    %vm874 = vcmp.gt.f32.partialorder %v409, 20.0
    %vm875 = vcmp.gt.f32.partialorder %v413, 20.0
    %vm876 = vcmp.gt.f32.partialorder %v415, 20.0
    %vm877 = vcmp.gt.f32.partialorder %v419, 20.0
    %vm878 = vcmp.gt.f32.partialorder %v421, 20.0
    %vm879 = vcmp.gt.f32.partialorder %v425, 20.0
    %vm880 = vcmp.gt.f32.partialorder %v427, 20.0
    %vm881 = vcmp.gt.f32.partialorder %v431, 20.0
    %vm882 = vcmp.gt.f32.partialorder %v433, 20.0
    %vm883 = vcmp.gt.f32.partialorder %v437, 20.0
    %vm884 = vcmp.gt.f32.partialorder %v439, 20.0
    %vm885 = vcmp.gt.f32.partialorder %v443, 20.0
    %vm886 = vcmp.gt.f32.partialorder %v445, 20.0
    %vm887 = vcmp.gt.f32.partialorder %v449, 20.0
    %vm888 = vcmp.gt.f32.partialorder %v451, 20.0
    %vm889 = vcmp.gt.f32.partialorder %v455, 20.0
    %vm890 = vcmp.gt.f32.partialorder %v457, 20.0
    %vm891 = vcmp.gt.f32.partialorder %v461, 20.0
    %vm892 = vcmp.gt.f32.partialorder %v463, 20.0
    %vm893 = vcmp.gt.f32.partialorder %v467, 20.0
    %vm894 = vcmp.gt.f32.partialorder %v469, 20.0
    %vm895 = vcmp.gt.f32.partialorder %v473, 20.0
    %vm896 = vcmp.gt.f32.partialorder %v475, 20.0
    %vm897 = vcmp.gt.f32.partialorder %v479, 20.0
    %vm898 = vcmp.gt.f32.partialorder %v481, 20.0
    %v899 = vsel %vm867, %v389, %v587
    %v900 = vsel %vm868, %v391, %v596
    %v901 = vsel %vm869, %v395, %v605
    %v902 = vsel %vm870, %v397, %v614
    %v903 = vsel %vm871, %v401, %v623
    %v904 = vsel %vm872, %v403, %v632
    %v905 = vsel %vm873, %v407, %v641
    %v906 = vsel %vm874, %v409, %v650
    %v907 = vsel %vm875, %v413, %v659
    %v908 = vsel %vm876, %v415, %v668
    %v909 = vsel %vm877, %v419, %v677
    %v910 = vsel %vm878, %v421, %v686
    %v911 = vsel %vm879, %v425, %v695
    %v912 = vsel %vm880, %v427, %v704
    %v913 = vsel %vm881, %v431, %v713
    %v914 = vsel %vm882, %v433, %v722
    %v915 = vsel %vm883, %v437, %v731
    %v916 = vsel %vm884, %v439, %v740
    %v917 = vsel %vm885, %v443, %v749
    %v918 = vsel %vm886, %v445, %v758
    %v919 = vsel %vm887, %v449, %v767
    %v920 = vsel %vm888, %v451, %v776
    %v921 = vsel %vm889, %v455, %v785
    %v922 = vsel %vm890, %v457, %v794
    %v923 = vsel %vm891, %v461, %v803
    %v924 = vsel %vm892, %v463, %v812
    %v925 = vsel %vm893, %v467, %v821
    %v926 = vsel %vm894, %v469, %v830
    %v927 = vsel %vm895, %v473, %v839
    %v928 = vsel %vm896, %v475, %v848
    %v929 = vsel %vm897, %v479, %v857
    %v930 = vsel %vm898, %v481, %v866
    %v931 = vld [vmem:[%s3] sm:$0xff]
    %v932 = vld [vmem:[%s3 + $0x8] sm:$0xff]
    %v933 = vld [vmem:[%s3 + $0x10] sm:$0xff]
    %v934 = vld [vmem:[%s3 + $0x18] sm:$0xff]
    %v935 = vld [vmem:[%s3 + $0x20] sm:$0xff]
    %v936 = vld [vmem:[%s3 + $0x28] sm:$0xff]
    %v937 = vld [vmem:[%s3 + $0x30] sm:$0xff]
    %v938 = vld [vmem:[%s3 + $0x38] sm:$0xff]
    %v939 = vld [vmem:[%s3 + $0x40] sm:$0xff]
    %v940 = vld [vmem:[%s3 + $0x48] sm:$0xff]
    %v941 = vld [vmem:[%s3 + $0x50] sm:$0xff]
    %v942 = vld [vmem:[%s3 + $0x58] sm:$0xff]
    %v943 = vld [vmem:[%s3 + $0x60] sm:$0xff]
    %v944 = vld [vmem:[%s3 + $0x68] sm:$0xff]
    %v945 = vld [vmem:[%s3 + $0x70] sm:$0xff]
    %v946 = vld [vmem:[%s3 + $0x78] sm:$0xff]
    %v947 = vld [vmem:[%s4] sm:$0xff]
    %v948 = vld [vmem:[%s4 + $0x8] sm:$0xff]
    %v949 = vld [vmem:[%s4 + $0x10] sm:$0xff]
    %v950 = vld [vmem:[%s4 + $0x18] sm:$0xff]
    %v951 = vld [vmem:[%s4 + $0x20] sm:$0xff]
    %v952 = vld [vmem:[%s4 + $0x28] sm:$0xff]
    %v953 = vld [vmem:[%s4 + $0x30] sm:$0xff]
    %v954 = vld [vmem:[%s4 + $0x38] sm:$0xff]
    %v955 = vld [vmem:[%s4 + $0x40] sm:$0xff]
    %v956 = vld [vmem:[%s4 + $0x48] sm:$0xff]
    %v957 = vld [vmem:[%s4 + $0x50] sm:$0xff]
    %v958 = vld [vmem:[%s4 + $0x58] sm:$0xff]
    %v959 = vld [vmem:[%s4 + $0x60] sm:$0xff]
    %v960 = vld [vmem:[%s4 + $0x68] sm:$0xff]
    %v961 = vld [vmem:[%s4 + $0x70] sm:$0xff]
    %v962 = vld [vmem:[%s4 + $0x78] sm:$0xff]
    %964 = vset.pattern.permute.xlu0 0
    %965 = vperm.xlu0 %964, %v947
    %v966 = vpop.permute.xlu0 %965
    %969 = vset.pattern.permute.xlu0 0
    %970 = vperm.xlu0 %969, %v948
    %v971 = vpop.permute.xlu0 %970
    %974 = vset.pattern.permute.xlu0 0
    %975 = vperm.xlu0 %974, %v949
    %v976 = vpop.permute.xlu0 %975
    %979 = vset.pattern.permute.xlu0 0
    %980 = vperm.xlu0 %979, %v950
    %v981 = vpop.permute.xlu0 %980
    %984 = vset.pattern.permute.xlu0 0
    %985 = vperm.xlu0 %984, %v951
    %v986 = vpop.permute.xlu0 %985
    %989 = vset.pattern.permute.xlu0 0
    %990 = vperm.xlu0 %989, %v952
    %v991 = vpop.permute.xlu0 %990
    %994 = vset.pattern.permute.xlu0 0
    %995 = vperm.xlu0 %994, %v953
    %v996 = vpop.permute.xlu0 %995
    %999 = vset.pattern.permute.xlu0 0
    %1000 = vperm.xlu0 %999, %v954
    %v1001 = vpop.permute.xlu0 %1000
    %1004 = vset.pattern.permute.xlu0 0
    %1005 = vperm.xlu0 %1004, %v955
    %v1006 = vpop.permute.xlu0 %1005
    %1009 = vset.pattern.permute.xlu0 0
    %1010 = vperm.xlu0 %1009, %v956
    %v1011 = vpop.permute.xlu0 %1010
    %1014 = vset.pattern.permute.xlu0 0
    %1015 = vperm.xlu0 %1014, %v957
    %v1016 = vpop.permute.xlu0 %1015
    %1019 = vset.pattern.permute.xlu0 0
    %1020 = vperm.xlu0 %1019, %v958
    %v1021 = vpop.permute.xlu0 %1020
    %1024 = vset.pattern.permute.xlu0 0
    %1025 = vperm.xlu0 %1024, %v959
    %v1026 = vpop.permute.xlu0 %1025
    %1029 = vset.pattern.permute.xlu0 0
    %1030 = vperm.xlu0 %1029, %v960
    %v1031 = vpop.permute.xlu0 %1030
    %1034 = vset.pattern.permute.xlu0 0
    %1035 = vperm.xlu0 %1034, %v961
    %v1036 = vpop.permute.xlu0 %1035
    %1039 = vset.pattern.permute.xlu0 0
    %1040 = vperm.xlu0 %1039, %v962
    %v1041 = vpop.permute.xlu0 %1040
    %1043 = vmatprep.subr.mxu0 %v900
    %1044 = vmatpush1.msra.mxu0 %v899
    %1045 = vmatprep.subr.mxu0 %v902
    %1046 = vmatpush1.msra.mxu0 %v901
    %1047 = vmatprep.subr.mxu0 %v904
    %1048 = vmatpush1.msra.mxu0 %v903
    %1049 = vmatprep.subr.mxu0 %v906
    %1050 = vmatpush1.msra.mxu0 %v905
    %1051 = vmatprep.subr.mxu0 %v908
    %1052 = vmatpush1.msra.mxu0 %v907
    %1053 = vmatprep.subr.mxu0 %v910
    %1054 = vmatpush1.msra.mxu0 %v909
    %1055 = vmatprep.subr.mxu0 %v912
    %1056 = vmatpush1.msra.mxu0 %v911
    %1057 = vmatprep.subr.mxu0 %v914
    %1058 = vmatpush1.msra.mxu0 %v913
    %1059 = vmatprep.subr.mxu0 %v916
    %1060 = vmatpush1.msra.mxu0 %v915
    %1061 = vmatprep.subr.mxu0 %v918
    %1062 = vmatpush1.msra.mxu0 %v917
    %1063 = vmatprep.subr.mxu0 %v920
    %1064 = vmatpush1.msra.mxu0 %v919
    %1065 = vmatprep.subr.mxu0 %v922
    %1066 = vmatpush1.msra.mxu0 %v921
    %1067 = vmatprep.subr.mxu0 %v924
    %1068 = vmatpush1.msra.mxu0 %v923
    %1069 = vmatprep.subr.mxu0 %v926
    %1070 = vmatpush1.msra.mxu0 %v925
    %1071 = vmatprep.subr.mxu0 %v928
    %1072 = vmatpush1.msra.mxu0 %v927
    %1073 = vmatprep.subr.mxu0 %v930
    %1074 = vmatpush1.msra.mxu0 %v929
    %1075 = vmatprep.subr.mxu0 0.0
    %1076 = vmatpush1.msra.mxu0 0.0
    %1077 = vmatprep.subr.mxu0 0.0
    %1078 = vmatpush1.msra.mxu0 0.0
    %1079 = vmatprep.subr.mxu0 0.0
    %1080 = vmatpush1.msra.mxu0 0.0
    %1081 = vmatprep.subr.mxu0 0.0
    %1082 = vmatpush1.msra.mxu0 0.0
    %1083 = vmatprep.subr.mxu0 0.0
    %1084 = vmatpush1.msra.mxu0 0.0
    %1085 = vmatprep.subr.mxu0 0.0
    %1086 = vmatpush1.msra.mxu0 0.0
    %1087 = vmatprep.subr.mxu0 0.0
    %1088 = vmatpush1.msra.mxu0 0.0
    %1089 = vmatprep.subr.mxu0 0.0
    %1090 = vmatpush1.msra.mxu0 0.0
    %1091 = vmatprep.subr.mxu0 0.0
    %1092 = vmatpush1.msra.mxu0 0.0
    %1093 = vmatprep.subr.mxu0 0.0
    %1094 = vmatpush1.msra.mxu0 0.0
    %1095 = vmatprep.subr.mxu0 0.0
    %1096 = vmatpush1.msra.mxu0 0.0
    %1097 = vmatprep.subr.mxu0 0.0
    %1098 = vmatpush1.msra.mxu0 0.0
    %1099 = vmatprep.subr.mxu0 0.0
    %1100 = vmatpush1.msra.mxu0 0.0
    %1101 = vmatprep.subr.mxu0 0.0
    %1102 = vmatpush1.msra.mxu0 0.0
    %1103 = vmatprep.subr.mxu0 0.0
    %1104 = vmatpush1.msra.mxu0 0.0
    %1105 = vmatprep.subr.mxu0 0.0
    %1106 = vmatpush1.msra.mxu0 0.0
    %1107 = vmatprep.mubr.f32.mxu0 0.0
    %1108 = vmatmul.mubr.f32.gmra.mrb[0].mxu0 %v931
    %v1109 = vpop.f32.mrb[0].mxu0
    %v1110 = vadd.f32 %v966, %v1109
    %v1111 = vpop.f32.mrb[0].mxu0
    %v1112 = vadd.f32 %v966, %v1111
    %1113 = vmatprep.mubr.f32.mxu0 0.0
    %1114 = vmatmul.mubr.f32.gmra.mrb[0].mxu0 %v932
    %v1115 = vpop.f32.mrb[0].mxu0
    %v1116 = vadd.f32 %v971, %v1115
    %v1117 = vpop.f32.mrb[0].mxu0
    %v1118 = vadd.f32 %v971, %v1117
    %1119 = vmatprep.mubr.f32.mxu0 0.0
    %1120 = vmatmul.mubr.f32.gmra.mrb[0].mxu0 %v933
    %v1121 = vpop.f32.mrb[0].mxu0
    %v1122 = vadd.f32 %v976, %v1121
    %v1123 = vpop.f32.mrb[0].mxu0
    %v1124 = vadd.f32 %v976, %v1123
    %1125 = vmatprep.mubr.f32.mxu0 0.0
    %1126 = vmatmul.mubr.f32.gmra.mrb[0].mxu0 %v934
    %v1127 = vpop.f32.mrb[0].mxu0
    %v1128 = vadd.f32 %v981, %v1127
    %v1129 = vpop.f32.mrb[0].mxu0
    %v1130 = vadd.f32 %v981, %v1129
    %1131 = vmatprep.mubr.f32.mxu0 0.0
    %1132 = vmatmul.mubr.f32.gmra.mrb[0].mxu0 %v935
    %v1133 = vpop.f32.mrb[0].mxu0
    %v1134 = vadd.f32 %v986, %v1133
    %v1135 = vpop.f32.mrb[0].mxu0
    %v1136 = vadd.f32 %v986, %v1135
    %1137 = vmatprep.mubr.f32.mxu0 0.0
    %1138 = vmatmul.mubr.f32.gmra.mrb[0].mxu0 %v936
    %v1139 = vpop.f32.mrb[0].mxu0
    %v1140 = vadd.f32 %v991, %v1139
    %v1141 = vpop.f32.mrb[0].mxu0
    %v1142 = vadd.f32 %v991, %v1141
    %1143 = vmatprep.mubr.f32.mxu0 0.0
    %1144 = vmatmul.mubr.f32.gmra.mrb[0].mxu0 %v937
    %v1145 = vpop.f32.mrb[0].mxu0
    %v1146 = vadd.f32 %v996, %v1145
    %v1147 = vpop.f32.mrb[0].mxu0
    %v1148 = vadd.f32 %v996, %v1147
    %1149 = vmatprep.mubr.f32.mxu0 0.0
    %1150 = vmatmul.mubr.f32.gmra.mrb[0].mxu0 %v938
    %v1151 = vpop.f32.mrb[0].mxu0
    %v1152 = vadd.f32 %v1001, %v1151
    %v1153 = vpop.f32.mrb[0].mxu0
    %v1154 = vadd.f32 %v1001, %v1153
    %1155 = vmatprep.mubr.f32.mxu0 0.0
    %1156 = vmatmul.mubr.f32.gmra.mrb[0].mxu0 %v939
    %v1157 = vpop.f32.mrb[0].mxu0
    %v1158 = vadd.f32 %v1006, %v1157
    %v1159 = vpop.f32.mrb[0].mxu0
    %v1160 = vadd.f32 %v1006, %v1159
    %1161 = vmatprep.mubr.f32.mxu0 0.0
    %1162 = vmatmul.mubr.f32.gmra.mrb[0].mxu0 %v940
    %v1163 = vpop.f32.mrb[0].mxu0
    %v1164 = vadd.f32 %v1011, %v1163
    %v1165 = vpop.f32.mrb[0].mxu0
    %v1166 = vadd.f32 %v1011, %v1165
    %1167 = vmatprep.mubr.f32.mxu0 0.0
    %1168 = vmatmul.mubr.f32.gmra.mrb[0].mxu0 %v941
    %v1169 = vpop.f32.mrb[0].mxu0
    %v1170 = vadd.f32 %v1016, %v1169
    %v1171 = vpop.f32.mrb[0].mxu0
    %v1172 = vadd.f32 %v1016, %v1171
    %1173 = vmatprep.mubr.f32.mxu0 0.0
    %1174 = vmatmul.mubr.f32.gmra.mrb[0].mxu0 %v942
    %v1175 = vpop.f32.mrb[0].mxu0
    %v1176 = vadd.f32 %v1021, %v1175
    %v1177 = vpop.f32.mrb[0].mxu0
    %v1178 = vadd.f32 %v1021, %v1177
    %1179 = vmatprep.mubr.f32.mxu0 0.0
    %1180 = vmatmul.mubr.f32.gmra.mrb[0].mxu0 %v943
    %v1181 = vpop.f32.mrb[0].mxu0
    %v1182 = vadd.f32 %v1026, %v1181
    %v1183 = vpop.f32.mrb[0].mxu0
    %v1184 = vadd.f32 %v1026, %v1183
    %1185 = vmatprep.mubr.f32.mxu0 0.0
    %1186 = vmatmul.mubr.f32.gmra.mrb[0].mxu0 %v944
    %v1187 = vpop.f32.mrb[0].mxu0
    %v1188 = vadd.f32 %v1031, %v1187
    %v1189 = vpop.f32.mrb[0].mxu0
    %v1190 = vadd.f32 %v1031, %v1189
    %1191 = vmatprep.mubr.f32.mxu0 0.0
    %1192 = vmatmul.mubr.f32.gmra.mrb[0].mxu0 %v945
    %v1193 = vpop.f32.mrb[0].mxu0
    %v1194 = vadd.f32 %v1036, %v1193
    %v1195 = vpop.f32.mrb[0].mxu0
    %v1196 = vadd.f32 %v1036, %v1195
    %1197 = vmatprep.mubr.f32.mxu0 0.0
    %1198 = vmatmul.mubr.f32.gmra.mrb[0].mxu0 %v946
    %v1199 = vpop.f32.mrb[0].mxu0
    %v1200 = vadd.f32 %v1041, %v1199
    %v1201 = vpop.f32.mrb[0].mxu0
    %v1202 = vadd.f32 %v1041, %v1201
    %1203 = vdwg.mxu0
    %v1204 = vmin.f32 %v1110, 20.0
    %v1205 = vmin.f32 %v1112, 20.0
    %v1206 = vmin.f32 %v1116, 20.0
    %v1207 = vmin.f32 %v1118, 20.0
    %v1208 = vmin.f32 %v1122, 20.0
    %v1209 = vmin.f32 %v1124, 20.0
    %v1210 = vmin.f32 %v1128, 20.0
    %v1211 = vmin.f32 %v1130, 20.0
    %v1212 = vmin.f32 %v1134, 20.0
    %v1213 = vmin.f32 %v1136, 20.0
    %v1214 = vmin.f32 %v1140, 20.0
    %v1215 = vmin.f32 %v1142, 20.0
    %v1216 = vmin.f32 %v1146, 20.0
    %v1217 = vmin.f32 %v1148, 20.0
    %v1218 = vmin.f32 %v1152, 20.0
    %v1219 = vmin.f32 %v1154, 20.0
    %v1220 = vmin.f32 %v1158, 20.0
    %v1221 = vmin.f32 %v1160, 20.0
    %v1222 = vmin.f32 %v1164, 20.0
    %v1223 = vmin.f32 %v1166, 20.0
    %v1224 = vmin.f32 %v1170, 20.0
    %v1225 = vmin.f32 %v1172, 20.0
    %v1226 = vmin.f32 %v1176, 20.0
    %v1227 = vmin.f32 %v1178, 20.0
    %v1228 = vmin.f32 %v1182, 20.0
    %v1229 = vmin.f32 %v1184, 20.0
    %v1230 = vmin.f32 %v1188, 20.0
    %v1231 = vmin.f32 %v1190, 20.0
    %v1232 = vmin.f32 %v1194, 20.0
    %v1233 = vmin.f32 %v1196, 20.0
    %v1234 = vmin.f32 %v1200, 20.0
    %v1235 = vmin.f32 %v1202, 20.0
    %v1236 = vmul.f32 %v1204, 1.442695
    %v1237 = vpow.pop %v1236
    %v1238 = vmul.f32 %v1205, 1.442695
    %v1239 = vpow.pop %v1238
    %v1240 = vmul.f32 %v1206, 1.442695
    %v1241 = vpow.pop %v1240
    %v1242 = vmul.f32 %v1207, 1.442695
    %v1243 = vpow.pop %v1242
    %v1244 = vmul.f32 %v1208, 1.442695
    %v1245 = vpow.pop %v1244
    %v1246 = vmul.f32 %v1209, 1.442695
    %v1247 = vpow.pop %v1246
    %v1248 = vmul.f32 %v1210, 1.442695
    %v1249 = vpow.pop %v1248
    %v1250 = vmul.f32 %v1211, 1.442695
    %v1251 = vpow.pop %v1250
    %v1252 = vmul.f32 %v1212, 1.442695
    %v1253 = vpow.pop %v1252
    %v1254 = vmul.f32 %v1213, 1.442695
    %v1255 = vpow.pop %v1254
    %v1256 = vmul.f32 %v1214, 1.442695
    %v1257 = vpow.pop %v1256
    %v1258 = vmul.f32 %v1215, 1.442695
    %v1259 = vpow.pop %v1258
    %v1260 = vmul.f32 %v1216, 1.442695
    %v1261 = vpow.pop %v1260
    %v1262 = vmul.f32 %v1217, 1.442695
    %v1263 = vpow.pop %v1262
    %v1264 = vmul.f32 %v1218, 1.442695
    %v1265 = vpow.pop %v1264
    %v1266 = vmul.f32 %v1219, 1.442695
    %v1267 = vpow.pop %v1266
    %v1268 = vmul.f32 %v1220, 1.442695
    %v1269 = vpow.pop %v1268
    %v1270 = vmul.f32 %v1221, 1.442695
    %v1271 = vpow.pop %v1270
    %v1272 = vmul.f32 %v1222, 1.442695
    %v1273 = vpow.pop %v1272
    %v1274 = vmul.f32 %v1223, 1.442695
    %v1275 = vpow.pop %v1274
    %v1276 = vmul.f32 %v1224, 1.442695
    %v1277 = vpow.pop %v1276
    %v1278 = vmul.f32 %v1225, 1.442695
    %v1279 = vpow.pop %v1278
    %v1280 = vmul.f32 %v1226, 1.442695
    %v1281 = vpow.pop %v1280
    %v1282 = vmul.f32 %v1227, 1.442695
    %v1283 = vpow.pop %v1282
    %v1284 = vmul.f32 %v1228, 1.442695
    %v1285 = vpow.pop %v1284
    %v1286 = vmul.f32 %v1229, 1.442695
    %v1287 = vpow.pop %v1286
    %v1288 = vmul.f32 %v1230, 1.442695
    %v1289 = vpow.pop %v1288
    %v1290 = vmul.f32 %v1231, 1.442695
    %v1291 = vpow.pop %v1290
    %v1292 = vmul.f32 %v1232, 1.442695
    %v1293 = vpow.pop %v1292
    %v1294 = vmul.f32 %v1233, 1.442695
    %v1295 = vpow.pop %v1294
    %v1296 = vmul.f32 %v1234, 1.442695
    %v1297 = vpow.pop %v1296
    %v1298 = vmul.f32 %v1235, 1.442695
    %v1299 = vpow.pop %v1298
    %v1300 = vadd.f32 %v1237, 1.0
    %v1301 = vlog2.pop %v1300
    %v1302 = vmul.f32 %v1301, 0.6931472
    %v1303 = vmul.f32 -0.5, %v1237
    %v1304 = vadd.f32 %v1303, 1.0
    %v1305 = vmul.f32 %v1304, %v1237
    %v1306 = vand.u32 2147483647, %v1237
    %vm1307 = vcmp.lt.f32.partialorder %v1306, 0.0004427343
    %v1308 = vsel %vm1307, %v1305, %v1302
    %v1309 = vadd.f32 %v1239, 1.0
    %v1310 = vlog2.pop %v1309
    %v1311 = vmul.f32 %v1310, 0.6931472
    %v1312 = vmul.f32 -0.5, %v1239
    %v1313 = vadd.f32 %v1312, 1.0
    %v1314 = vmul.f32 %v1313, %v1239
    %v1315 = vand.u32 2147483647, %v1239
    %vm1316 = vcmp.lt.f32.partialorder %v1315, 0.0004427343
    %v1317 = vsel %vm1316, %v1314, %v1311
    %v1318 = vadd.f32 %v1241, 1.0
    %v1319 = vlog2.pop %v1318
    %v1320 = vmul.f32 %v1319, 0.6931472
    %v1321 = vmul.f32 -0.5, %v1241
    %v1322 = vadd.f32 %v1321, 1.0
    %v1323 = vmul.f32 %v1322, %v1241
    %v1324 = vand.u32 2147483647, %v1241
    %vm1325 = vcmp.lt.f32.partialorder %v1324, 0.0004427343
    %v1326 = vsel %vm1325, %v1323, %v1320
    %v1327 = vadd.f32 %v1243, 1.0
    %v1328 = vlog2.pop %v1327
    %v1329 = vmul.f32 %v1328, 0.6931472
    %v1330 = vmul.f32 -0.5, %v1243
    %v1331 = vadd.f32 %v1330, 1.0
    %v1332 = vmul.f32 %v1331, %v1243
    %v1333 = vand.u32 2147483647, %v1243
    %vm1334 = vcmp.lt.f32.partialorder %v1333, 0.0004427343
    %v1335 = vsel %vm1334, %v1332, %v1329
    %v1336 = vadd.f32 %v1245, 1.0
    %v1337 = vlog2.pop %v1336
    %v1338 = vmul.f32 %v1337, 0.6931472
    %v1339 = vmul.f32 -0.5, %v1245
    %v1340 = vadd.f32 %v1339, 1.0
    %v1341 = vmul.f32 %v1340, %v1245
    %v1342 = vand.u32 2147483647, %v1245
    %vm1343 = vcmp.lt.f32.partialorder %v1342, 0.0004427343
    %v1344 = vsel %vm1343, %v1341, %v1338
    %v1345 = vadd.f32 %v1247, 1.0
    %v1346 = vlog2.pop %v1345
    %v1347 = vmul.f32 %v1346, 0.6931472
    %v1348 = vmul.f32 -0.5, %v1247
    %v1349 = vadd.f32 %v1348, 1.0
    %v1350 = vmul.f32 %v1349, %v1247
    %v1351 = vand.u32 2147483647, %v1247
    %vm1352 = vcmp.lt.f32.partialorder %v1351, 0.0004427343
    %v1353 = vsel %vm1352, %v1350, %v1347
    %v1354 = vadd.f32 %v1249, 1.0
    %v1355 = vlog2.pop %v1354
    %v1356 = vmul.f32 %v1355, 0.6931472
    %v1357 = vmul.f32 -0.5, %v1249
    %v1358 = vadd.f32 %v1357, 1.0
    %v1359 = vmul.f32 %v1358, %v1249
    %v1360 = vand.u32 2147483647, %v1249
    %vm1361 = vcmp.lt.f32.partialorder %v1360, 0.0004427343
    %v1362 = vsel %vm1361, %v1359, %v1356
    %v1363 = vadd.f32 %v1251, 1.0
    %v1364 = vlog2.pop %v1363
    %v1365 = vmul.f32 %v1364, 0.6931472
    %v1366 = vmul.f32 -0.5, %v1251
    %v1367 = vadd.f32 %v1366, 1.0
    %v1368 = vmul.f32 %v1367, %v1251
    %v1369 = vand.u32 2147483647, %v1251
    %vm1370 = vcmp.lt.f32.partialorder %v1369, 0.0004427343
    %v1371 = vsel %vm1370, %v1368, %v1365
    %v1372 = vadd.f32 %v1253, 1.0
    %v1373 = vlog2.pop %v1372
    %v1374 = vmul.f32 %v1373, 0.6931472
    %v1375 = vmul.f32 -0.5, %v1253
    %v1376 = vadd.f32 %v1375, 1.0
    %v1377 = vmul.f32 %v1376, %v1253
    %v1378 = vand.u32 2147483647, %v1253
    %vm1379 = vcmp.lt.f32.partialorder %v1378, 0.0004427343
    %v1380 = vsel %vm1379, %v1377, %v1374
    %v1381 = vadd.f32 %v1255, 1.0
    %v1382 = vlog2.pop %v1381
    %v1383 = vmul.f32 %v1382, 0.6931472
    %v1384 = vmul.f32 -0.5, %v1255
    %v1385 = vadd.f32 %v1384, 1.0
    %v1386 = vmul.f32 %v1385, %v1255
    %v1387 = vand.u32 2147483647, %v1255
    %vm1388 = vcmp.lt.f32.partialorder %v1387, 0.0004427343
    %v1389 = vsel %vm1388, %v1386, %v1383
    %v1390 = vadd.f32 %v1257, 1.0
    %v1391 = vlog2.pop %v1390
    %v1392 = vmul.f32 %v1391, 0.6931472
    %v1393 = vmul.f32 -0.5, %v1257
    %v1394 = vadd.f32 %v1393, 1.0
    %v1395 = vmul.f32 %v1394, %v1257
    %v1396 = vand.u32 2147483647, %v1257
    %vm1397 = vcmp.lt.f32.partialorder %v1396, 0.0004427343
    %v1398 = vsel %vm1397, %v1395, %v1392
    %v1399 = vadd.f32 %v1259, 1.0
    %v1400 = vlog2.pop %v1399
    %v1401 = vmul.f32 %v1400, 0.6931472
    %v1402 = vmul.f32 -0.5, %v1259
    %v1403 = vadd.f32 %v1402, 1.0
    %v1404 = vmul.f32 %v1403, %v1259
    %v1405 = vand.u32 2147483647, %v1259
    %vm1406 = vcmp.lt.f32.partialorder %v1405, 0.0004427343
    %v1407 = vsel %vm1406, %v1404, %v1401
    %v1408 = vadd.f32 %v1261, 1.0
    %v1409 = vlog2.pop %v1408
    %v1410 = vmul.f32 %v1409, 0.6931472
    %v1411 = vmul.f32 -0.5, %v1261
    %v1412 = vadd.f32 %v1411, 1.0
    %v1413 = vmul.f32 %v1412, %v1261
    %v1414 = vand.u32 2147483647, %v1261
    %vm1415 = vcmp.lt.f32.partialorder %v1414, 0.0004427343
    %v1416 = vsel %vm1415, %v1413, %v1410
    %v1417 = vadd.f32 %v1263, 1.0
    %v1418 = vlog2.pop %v1417
    %v1419 = vmul.f32 %v1418, 0.6931472
    %v1420 = vmul.f32 -0.5, %v1263
    %v1421 = vadd.f32 %v1420, 1.0
    %v1422 = vmul.f32 %v1421, %v1263
    %v1423 = vand.u32 2147483647, %v1263
    %vm1424 = vcmp.lt.f32.partialorder %v1423, 0.0004427343
    %v1425 = vsel %vm1424, %v1422, %v1419
    %v1426 = vadd.f32 %v1265, 1.0
    %v1427 = vlog2.pop %v1426
    %v1428 = vmul.f32 %v1427, 0.6931472
    %v1429 = vmul.f32 -0.5, %v1265
    %v1430 = vadd.f32 %v1429, 1.0
    %v1431 = vmul.f32 %v1430, %v1265
    %v1432 = vand.u32 2147483647, %v1265
    %vm1433 = vcmp.lt.f32.partialorder %v1432, 0.0004427343
    %v1434 = vsel %vm1433, %v1431, %v1428
    %v1435 = vadd.f32 %v1267, 1.0
    %v1436 = vlog2.pop %v1435
    %v1437 = vmul.f32 %v1436, 0.6931472
    %v1438 = vmul.f32 -0.5, %v1267
    %v1439 = vadd.f32 %v1438, 1.0
    %v1440 = vmul.f32 %v1439, %v1267
    %v1441 = vand.u32 2147483647, %v1267
    %vm1442 = vcmp.lt.f32.partialorder %v1441, 0.0004427343
    %v1443 = vsel %vm1442, %v1440, %v1437
    %v1444 = vadd.f32 %v1269, 1.0
    %v1445 = vlog2.pop %v1444
    %v1446 = vmul.f32 %v1445, 0.6931472
    %v1447 = vmul.f32 -0.5, %v1269
    %v1448 = vadd.f32 %v1447, 1.0
    %v1449 = vmul.f32 %v1448, %v1269
    %v1450 = vand.u32 2147483647, %v1269
    %vm1451 = vcmp.lt.f32.partialorder %v1450, 0.0004427343
    %v1452 = vsel %vm1451, %v1449, %v1446
    %v1453 = vadd.f32 %v1271, 1.0
    %v1454 = vlog2.pop %v1453
    %v1455 = vmul.f32 %v1454, 0.6931472
    %v1456 = vmul.f32 -0.5, %v1271
    %v1457 = vadd.f32 %v1456, 1.0
    %v1458 = vmul.f32 %v1457, %v1271
    %v1459 = vand.u32 2147483647, %v1271
    %vm1460 = vcmp.lt.f32.partialorder %v1459, 0.0004427343
    %v1461 = vsel %vm1460, %v1458, %v1455
    %v1462 = vadd.f32 %v1273, 1.0
    %v1463 = vlog2.pop %v1462
    %v1464 = vmul.f32 %v1463, 0.6931472
    %v1465 = vmul.f32 -0.5, %v1273
    %v1466 = vadd.f32 %v1465, 1.0
    %v1467 = vmul.f32 %v1466, %v1273
    %v1468 = vand.u32 2147483647, %v1273
    %vm1469 = vcmp.lt.f32.partialorder %v1468, 0.0004427343
    %v1470 = vsel %vm1469, %v1467, %v1464
    %v1471 = vadd.f32 %v1275, 1.0
    %v1472 = vlog2.pop %v1471
    %v1473 = vmul.f32 %v1472, 0.6931472
    %v1474 = vmul.f32 -0.5, %v1275
    %v1475 = vadd.f32 %v1474, 1.0
    %v1476 = vmul.f32 %v1475, %v1275
    %v1477 = vand.u32 2147483647, %v1275
    %vm1478 = vcmp.lt.f32.partialorder %v1477, 0.0004427343
    %v1479 = vsel %vm1478, %v1476, %v1473
    %v1480 = vadd.f32 %v1277, 1.0
    %v1481 = vlog2.pop %v1480
    %v1482 = vmul.f32 %v1481, 0.6931472
    %v1483 = vmul.f32 -0.5, %v1277
    %v1484 = vadd.f32 %v1483, 1.0
    %v1485 = vmul.f32 %v1484, %v1277
    %v1486 = vand.u32 2147483647, %v1277
    %vm1487 = vcmp.lt.f32.partialorder %v1486, 0.0004427343
    %v1488 = vsel %vm1487, %v1485, %v1482
    %v1489 = vadd.f32 %v1279, 1.0
    %v1490 = vlog2.pop %v1489
    %v1491 = vmul.f32 %v1490, 0.6931472
    %v1492 = vmul.f32 -0.5, %v1279
    %v1493 = vadd.f32 %v1492, 1.0
    %v1494 = vmul.f32 %v1493, %v1279
    %v1495 = vand.u32 2147483647, %v1279
    %vm1496 = vcmp.lt.f32.partialorder %v1495, 0.0004427343
    %v1497 = vsel %vm1496, %v1494, %v1491
    %v1498 = vadd.f32 %v1281, 1.0
    %v1499 = vlog2.pop %v1498
    %v1500 = vmul.f32 %v1499, 0.6931472
    %v1501 = vmul.f32 -0.5, %v1281
    %v1502 = vadd.f32 %v1501, 1.0
    %v1503 = vmul.f32 %v1502, %v1281
    %v1504 = vand.u32 2147483647, %v1281
    %vm1505 = vcmp.lt.f32.partialorder %v1504, 0.0004427343
    %v1506 = vsel %vm1505, %v1503, %v1500
    %v1507 = vadd.f32 %v1283, 1.0
    %v1508 = vlog2.pop %v1507
    %v1509 = vmul.f32 %v1508, 0.6931472
    %v1510 = vmul.f32 -0.5, %v1283
    %v1511 = vadd.f32 %v1510, 1.0
    %v1512 = vmul.f32 %v1511, %v1283
    %v1513 = vand.u32 2147483647, %v1283
    %vm1514 = vcmp.lt.f32.partialorder %v1513, 0.0004427343
    %v1515 = vsel %vm1514, %v1512, %v1509
    %v1516 = vadd.f32 %v1285, 1.0
    %v1517 = vlog2.pop %v1516
    %v1518 = vmul.f32 %v1517, 0.6931472
    %v1519 = vmul.f32 -0.5, %v1285
    %v1520 = vadd.f32 %v1519, 1.0
    %v1521 = vmul.f32 %v1520, %v1285
    %v1522 = vand.u32 2147483647, %v1285
    %vm1523 = vcmp.lt.f32.partialorder %v1522, 0.0004427343
    %v1524 = vsel %vm1523, %v1521, %v1518
    %v1525 = vadd.f32 %v1287, 1.0
    %v1526 = vlog2.pop %v1525
    %v1527 = vmul.f32 %v1526, 0.6931472
    %v1528 = vmul.f32 -0.5, %v1287
    %v1529 = vadd.f32 %v1528, 1.0
    %v1530 = vmul.f32 %v1529, %v1287
    %v1531 = vand.u32 2147483647, %v1287
    %vm1532 = vcmp.lt.f32.partialorder %v1531, 0.0004427343
    %v1533 = vsel %vm1532, %v1530, %v1527
    %v1534 = vadd.f32 %v1289, 1.0
    %v1535 = vlog2.pop %v1534
    %v1536 = vmul.f32 %v1535, 0.6931472
    %v1537 = vmul.f32 -0.5, %v1289
    %v1538 = vadd.f32 %v1537, 1.0
    %v1539 = vmul.f32 %v1538, %v1289
    %v1540 = vand.u32 2147483647, %v1289
    %vm1541 = vcmp.lt.f32.partialorder %v1540, 0.0004427343
    %v1542 = vsel %vm1541, %v1539, %v1536
    %v1543 = vadd.f32 %v1291, 1.0
    %v1544 = vlog2.pop %v1543
    %v1545 = vmul.f32 %v1544, 0.6931472
    %v1546 = vmul.f32 -0.5, %v1291
    %v1547 = vadd.f32 %v1546, 1.0
    %v1548 = vmul.f32 %v1547, %v1291
    %v1549 = vand.u32 2147483647, %v1291
    %vm1550 = vcmp.lt.f32.partialorder %v1549, 0.0004427343
    %v1551 = vsel %vm1550, %v1548, %v1545
    %v1552 = vadd.f32 %v1293, 1.0
    %v1553 = vlog2.pop %v1552
    %v1554 = vmul.f32 %v1553, 0.6931472
    %v1555 = vmul.f32 -0.5, %v1293
    %v1556 = vadd.f32 %v1555, 1.0
    %v1557 = vmul.f32 %v1556, %v1293
    %v1558 = vand.u32 2147483647, %v1293
    %vm1559 = vcmp.lt.f32.partialorder %v1558, 0.0004427343
    %v1560 = vsel %vm1559, %v1557, %v1554
    %v1561 = vadd.f32 %v1295, 1.0
    %v1562 = vlog2.pop %v1561
    %v1563 = vmul.f32 %v1562, 0.6931472
    %v1564 = vmul.f32 -0.5, %v1295
    %v1565 = vadd.f32 %v1564, 1.0
    %v1566 = vmul.f32 %v1565, %v1295
    %v1567 = vand.u32 2147483647, %v1295
    %vm1568 = vcmp.lt.f32.partialorder %v1567, 0.0004427343
    %v1569 = vsel %vm1568, %v1566, %v1563
    %v1570 = vadd.f32 %v1297, 1.0
    %v1571 = vlog2.pop %v1570
    %v1572 = vmul.f32 %v1571, 0.6931472
    %v1573 = vmul.f32 -0.5, %v1297
    %v1574 = vadd.f32 %v1573, 1.0
    %v1575 = vmul.f32 %v1574, %v1297
    %v1576 = vand.u32 2147483647, %v1297
    %vm1577 = vcmp.lt.f32.partialorder %v1576, 0.0004427343
    %v1578 = vsel %vm1577, %v1575, %v1572
    %v1579 = vadd.f32 %v1299, 1.0
    %v1580 = vlog2.pop %v1579
    %v1581 = vmul.f32 %v1580, 0.6931472
    %v1582 = vmul.f32 -0.5, %v1299
    %v1583 = vadd.f32 %v1582, 1.0
    %v1584 = vmul.f32 %v1583, %v1299
    %v1585 = vand.u32 2147483647, %v1299
    %vm1586 = vcmp.lt.f32.partialorder %v1585, 0.0004427343
    %v1587 = vsel %vm1586, %v1584, %v1581
    %vm1588 = vcmp.gt.f32.partialorder %v1110, 20.0
    %vm1589 = vcmp.gt.f32.partialorder %v1112, 20.0
    %vm1590 = vcmp.gt.f32.partialorder %v1116, 20.0
    %vm1591 = vcmp.gt.f32.partialorder %v1118, 20.0
    %vm1592 = vcmp.gt.f32.partialorder %v1122, 20.0
    %vm1593 = vcmp.gt.f32.partialorder %v1124, 20.0
    %vm1594 = vcmp.gt.f32.partialorder %v1128, 20.0
    %vm1595 = vcmp.gt.f32.partialorder %v1130, 20.0
    %vm1596 = vcmp.gt.f32.partialorder %v1134, 20.0
    %vm1597 = vcmp.gt.f32.partialorder %v1136, 20.0
    %vm1598 = vcmp.gt.f32.partialorder %v1140, 20.0
    %vm1599 = vcmp.gt.f32.partialorder %v1142, 20.0
    %vm1600 = vcmp.gt.f32.partialorder %v1146, 20.0
    %vm1601 = vcmp.gt.f32.partialorder %v1148, 20.0
    %vm1602 = vcmp.gt.f32.partialorder %v1152, 20.0
    %vm1603 = vcmp.gt.f32.partialorder %v1154, 20.0
    %vm1604 = vcmp.gt.f32.partialorder %v1158, 20.0
    %vm1605 = vcmp.gt.f32.partialorder %v1160, 20.0
    %vm1606 = vcmp.gt.f32.partialorder %v1164, 20.0
    %vm1607 = vcmp.gt.f32.partialorder %v1166, 20.0
    %vm1608 = vcmp.gt.f32.partialorder %v1170, 20.0
    %vm1609 = vcmp.gt.f32.partialorder %v1172, 20.0
    %vm1610 = vcmp.gt.f32.partialorder %v1176, 20.0
    %vm1611 = vcmp.gt.f32.partialorder %v1178, 20.0
    %vm1612 = vcmp.gt.f32.partialorder %v1182, 20.0
    %vm1613 = vcmp.gt.f32.partialorder %v1184, 20.0
    %vm1614 = vcmp.gt.f32.partialorder %v1188, 20.0
    %vm1615 = vcmp.gt.f32.partialorder %v1190, 20.0
    %vm1616 = vcmp.gt.f32.partialorder %v1194, 20.0
    %vm1617 = vcmp.gt.f32.partialorder %v1196, 20.0
    %vm1618 = vcmp.gt.f32.partialorder %v1200, 20.0
    %vm1619 = vcmp.gt.f32.partialorder %v1202, 20.0
    %v1620 = vsel %vm1588, %v1110, %v1308
    %v1621 = vsel %vm1589, %v1112, %v1317
    %v1622 = vsel %vm1590, %v1116, %v1326
    %v1623 = vsel %vm1591, %v1118, %v1335
    %v1624 = vsel %vm1592, %v1122, %v1344
    %v1625 = vsel %vm1593, %v1124, %v1353
    %v1626 = vsel %vm1594, %v1128, %v1362
    %v1627 = vsel %vm1595, %v1130, %v1371
    %v1628 = vsel %vm1596, %v1134, %v1380
    %v1629 = vsel %vm1597, %v1136, %v1389
    %v1630 = vsel %vm1598, %v1140, %v1398
    %v1631 = vsel %vm1599, %v1142, %v1407
    %v1632 = vsel %vm1600, %v1146, %v1416
    %v1633 = vsel %vm1601, %v1148, %v1425
    %v1634 = vsel %vm1602, %v1152, %v1434
    %v1635 = vsel %vm1603, %v1154, %v1443
    %v1636 = vsel %vm1604, %v1158, %v1452
    %v1637 = vsel %vm1605, %v1160, %v1461
    %v1638 = vsel %vm1606, %v1164, %v1470
    %v1639 = vsel %vm1607, %v1166, %v1479
    %v1640 = vsel %vm1608, %v1170, %v1488
    %v1641 = vsel %vm1609, %v1172, %v1497
    %v1642 = vsel %vm1610, %v1176, %v1506
    %v1643 = vsel %vm1611, %v1178, %v1515
    %v1644 = vsel %vm1612, %v1182, %v1524
    %v1645 = vsel %vm1613, %v1184, %v1533
    %v1646 = vsel %vm1614, %v1188, %v1542
    %v1647 = vsel %vm1615, %v1190, %v1551
    %v1648 = vsel %vm1616, %v1194, %v1560
    %v1649 = vsel %vm1617, %v1196, %v1569
    %v1650 = vsel %vm1618, %v1200, %v1578
    %v1651 = vsel %vm1619, %v1202, %v1587
    %v1652 = vld [vmem:[%s5] sm:$0xff]
    %v1653 = vld [vmem:[%s5 + $0x8] sm:$0xff]
    %v1654 = vld [vmem:[%s5 + $0x10] sm:$0xff]
    %v1655 = vld [vmem:[%s5 + $0x18] sm:$0xff]
    %v1656 = vld [vmem:[%s5 + $0x20] sm:$0xff]
    %v1657 = vld [vmem:[%s5 + $0x28] sm:$0xff]
    %v1658 = vld [vmem:[%s5 + $0x30] sm:$0xff]
    %v1659 = vld [vmem:[%s5 + $0x38] sm:$0xff]
    %v1660 = vld [vmem:[%s6] sm:$0xff]
    %v1661 = vld [vmem:[%s6 + $0x8] sm:$0xff]
    %v1662 = vld [vmem:[%s6 + $0x10] sm:$0xff]
    %v1663 = vld [vmem:[%s6 + $0x18] sm:$0xff]
    %v1664 = vld [vmem:[%s6 + $0x20] sm:$0xff]
    %v1665 = vld [vmem:[%s6 + $0x28] sm:$0xff]
    %v1666 = vld [vmem:[%s6 + $0x30] sm:$0xff]
    %v1667 = vld [vmem:[%s6 + $0x38] sm:$0xff]
    %1669 = vset.pattern.permute.xlu0 0
    %1670 = vperm.xlu0 %1669, %v1660
    %v1671 = vpop.permute.xlu0 %1670
    %1674 = vset.pattern.permute.xlu0 0
    %1675 = vperm.xlu0 %1674, %v1661
    %v1676 = vpop.permute.xlu0 %1675
    %1679 = vset.pattern.permute.xlu0 0
    %1680 = vperm.xlu0 %1679, %v1662
    %v1681 = vpop.permute.xlu0 %1680
    %1684 = vset.pattern.permute.xlu0 0
    %1685 = vperm.xlu0 %1684, %v1663
    %v1686 = vpop.permute.xlu0 %1685
    %1689 = vset.pattern.permute.xlu0 0
    %1690 = vperm.xlu0 %1689, %v1664
    %v1691 = vpop.permute.xlu0 %1690
    %1694 = vset.pattern.permute.xlu0 0
    %1695 = vperm.xlu0 %1694, %v1665
    %v1696 = vpop.permute.xlu0 %1695
    %1699 = vset.pattern.permute.xlu0 0
    %1700 = vperm.xlu0 %1699, %v1666
    %v1701 = vpop.permute.xlu0 %1700
    %1704 = vset.pattern.permute.xlu0 0
    %1705 = vperm.xlu0 %1704, %v1667
    %v1706 = vpop.permute.xlu0 %1705
    %1708 = vmatprep.subr.mxu0 %v1621
    %1709 = vmatpush1.msra.mxu0 %v1620
    %1710 = vmatprep.subr.mxu0 %v1623
    %1711 = vmatpush1.msra.mxu0 %v1622
    %1712 = vmatprep.subr.mxu0 %v1625
    %1713 = vmatpush1.msra.mxu0 %v1624
    %1714 = vmatprep.subr.mxu0 %v1627
    %1715 = vmatpush1.msra.mxu0 %v1626
    %1716 = vmatprep.subr.mxu0 %v1629
    %1717 = vmatpush1.msra.mxu0 %v1628
    %1718 = vmatprep.subr.mxu0 %v1631
    %1719 = vmatpush1.msra.mxu0 %v1630
    %1720 = vmatprep.subr.mxu0 %v1633
    %1721 = vmatpush1.msra.mxu0 %v1632
    %1722 = vmatprep.subr.mxu0 %v1635
    %1723 = vmatpush1.msra.mxu0 %v1634
    %1724 = vmatprep.subr.mxu0 %v1637
    %1725 = vmatpush1.msra.mxu0 %v1636
    %1726 = vmatprep.subr.mxu0 %v1639
    %1727 = vmatpush1.msra.mxu0 %v1638
    %1728 = vmatprep.subr.mxu0 %v1641
    %1729 = vmatpush1.msra.mxu0 %v1640
    %1730 = vmatprep.subr.mxu0 %v1643
    %1731 = vmatpush1.msra.mxu0 %v1642
    %1732 = vmatprep.subr.mxu0 %v1645
    %1733 = vmatpush1.msra.mxu0 %v1644
    %1734 = vmatprep.subr.mxu0 %v1647
    %1735 = vmatpush1.msra.mxu0 %v1646
    %1736 = vmatprep.subr.mxu0 %v1649
    %1737 = vmatpush1.msra.mxu0 %v1648
    %1738 = vmatprep.subr.mxu0 %v1651
    %1739 = vmatpush1.msra.mxu0 %v1650
    %1740 = vmatprep.subr.mxu0 0.0
    %1741 = vmatpush1.msra.mxu0 0.0
    %1742 = vmatprep.subr.mxu0 0.0
    %1743 = vmatpush1.msra.mxu0 0.0
    %1744 = vmatprep.subr.mxu0 0.0
    %1745 = vmatpush1.msra.mxu0 0.0
    %1746 = vmatprep.subr.mxu0 0.0
    %1747 = vmatpush1.msra.mxu0 0.0
    %1748 = vmatprep.subr.mxu0 0.0
    %1749 = vmatpush1.msra.mxu0 0.0
    %1750 = vmatprep.subr.mxu0 0.0
    %1751 = vmatpush1.msra.mxu0 0.0
    %1752 = vmatprep.subr.mxu0 0.0
    %1753 = vmatpush1.msra.mxu0 0.0
    %1754 = vmatprep.subr.mxu0 0.0
    %1755 = vmatpush1.msra.mxu0 0.0
    %1756 = vmatprep.subr.mxu0 0.0
    %1757 = vmatpush1.msra.mxu0 0.0
    %1758 = vmatprep.subr.mxu0 0.0
    %1759 = vmatpush1.msra.mxu0 0.0
    %1760 = vmatprep.subr.mxu0 0.0
    %1761 = vmatpush1.msra.mxu0 0.0
    %1762 = vmatprep.subr.mxu0 0.0
    %1763 = vmatpush1.msra.mxu0 0.0
    %1764 = vmatprep.subr.mxu0 0.0
    %1765 = vmatpush1.msra.mxu0 0.0
    %1766 = vmatprep.subr.mxu0 0.0
    %1767 = vmatpush1.msra.mxu0 0.0
    %1768 = vmatprep.subr.mxu0 0.0
    %1769 = vmatpush1.msra.mxu0 0.0
    %1770 = vmatprep.subr.mxu0 0.0
    %1771 = vmatpush1.msra.mxu0 0.0
    %1772 = vmatprep.mubr.f32.mxu0 0.0
    %1773 = vmatmul.mubr.f32.gmra.mrb[0].mxu0 %v1652
    %v1774 = vpop.f32.mrb[0].mxu0
    %v1775 = vadd.f32 %v1671, %v1774
    %v1776 = vpop.f32.mrb[0].mxu0
    %v1777 = vadd.f32 %v1671, %v1776
    %1778 = vmatprep.mubr.f32.mxu0 0.0
    %1779 = vmatmul.mubr.f32.gmra.mrb[0].mxu0 %v1653
    %v1780 = vpop.f32.mrb[0].mxu0
    %v1781 = vadd.f32 %v1676, %v1780
    %v1782 = vpop.f32.mrb[0].mxu0
    %v1783 = vadd.f32 %v1676, %v1782
    %1784 = vmatprep.mubr.f32.mxu0 0.0
    %1785 = vmatmul.mubr.f32.gmra.mrb[0].mxu0 %v1654
    %v1786 = vpop.f32.mrb[0].mxu0
    %v1787 = vadd.f32 %v1681, %v1786
    %v1788 = vpop.f32.mrb[0].mxu0
    %v1789 = vadd.f32 %v1681, %v1788
    %1790 = vmatprep.mubr.f32.mxu0 0.0
    %1791 = vmatmul.mubr.f32.gmra.mrb[0].mxu0 %v1655
    %v1792 = vpop.f32.mrb[0].mxu0
    %v1793 = vadd.f32 %v1686, %v1792
    %v1794 = vpop.f32.mrb[0].mxu0
    %v1795 = vadd.f32 %v1686, %v1794
    %1796 = vmatprep.mubr.f32.mxu0 0.0
    %1797 = vmatmul.mubr.f32.gmra.mrb[0].mxu0 %v1656
    %v1798 = vpop.f32.mrb[0].mxu0
    %v1799 = vadd.f32 %v1691, %v1798
    %v1800 = vpop.f32.mrb[0].mxu0
    %v1801 = vadd.f32 %v1691, %v1800
    %1802 = vmatprep.mubr.f32.mxu0 0.0
    %1803 = vmatmul.mubr.f32.gmra.mrb[0].mxu0 %v1657
    %v1804 = vpop.f32.mrb[0].mxu0
    %v1805 = vadd.f32 %v1696, %v1804
    %v1806 = vpop.f32.mrb[0].mxu0
    %v1807 = vadd.f32 %v1696, %v1806
    %1808 = vmatprep.mubr.f32.mxu0 0.0
    %1809 = vmatmul.mubr.f32.gmra.mrb[0].mxu0 %v1658
    %v1810 = vpop.f32.mrb[0].mxu0
    %v1811 = vadd.f32 %v1701, %v1810
    %v1812 = vpop.f32.mrb[0].mxu0
    %v1813 = vadd.f32 %v1701, %v1812
    %1814 = vmatprep.mubr.f32.mxu0 0.0
    %1815 = vmatmul.mubr.f32.gmra.mrb[0].mxu0 %v1659
    %v1816 = vpop.f32.mrb[0].mxu0
    %v1817 = vadd.f32 %v1706, %v1816
    %v1818 = vpop.f32.mrb[0].mxu0
    %v1819 = vadd.f32 %v1706, %v1818
    %1820 = vdwg.mxu0
    %v1821 = vmin.f32 %v1775, 20.0
    %v1822 = vmin.f32 %v1777, 20.0
    %v1823 = vmin.f32 %v1781, 20.0
    %v1824 = vmin.f32 %v1783, 20.0
    %v1825 = vmin.f32 %v1787, 20.0
    %v1826 = vmin.f32 %v1789, 20.0
    %v1827 = vmin.f32 %v1793, 20.0
    %v1828 = vmin.f32 %v1795, 20.0
    %v1829 = vmin.f32 %v1799, 20.0
    %v1830 = vmin.f32 %v1801, 20.0
    %v1831 = vmin.f32 %v1805, 20.0
    %v1832 = vmin.f32 %v1807, 20.0
    %v1833 = vmin.f32 %v1811, 20.0
    %v1834 = vmin.f32 %v1813, 20.0
    %v1835 = vmin.f32 %v1817, 20.0
    %v1836 = vmin.f32 %v1819, 20.0
    %v1837 = vmul.f32 %v1821, 1.442695
    %v1838 = vpow.pop %v1837
    %v1839 = vmul.f32 %v1822, 1.442695
    %v1840 = vpow.pop %v1839
    %v1841 = vmul.f32 %v1823, 1.442695
    %v1842 = vpow.pop %v1841
    %v1843 = vmul.f32 %v1824, 1.442695
    %v1844 = vpow.pop %v1843
    %v1845 = vmul.f32 %v1825, 1.442695
    %v1846 = vpow.pop %v1845
    %v1847 = vmul.f32 %v1826, 1.442695
    %v1848 = vpow.pop %v1847
    %v1849 = vmul.f32 %v1827, 1.442695
    %v1850 = vpow.pop %v1849
    %v1851 = vmul.f32 %v1828, 1.442695
    %v1852 = vpow.pop %v1851
    %v1853 = vmul.f32 %v1829, 1.442695
    %v1854 = vpow.pop %v1853
    %v1855 = vmul.f32 %v1830, 1.442695
    %v1856 = vpow.pop %v1855
    %v1857 = vmul.f32 %v1831, 1.442695
    %v1858 = vpow.pop %v1857
    %v1859 = vmul.f32 %v1832, 1.442695
    %v1860 = vpow.pop %v1859
    %v1861 = vmul.f32 %v1833, 1.442695
    %v1862 = vpow.pop %v1861
    %v1863 = vmul.f32 %v1834, 1.442695
    %v1864 = vpow.pop %v1863
    %v1865 = vmul.f32 %v1835, 1.442695
    %v1866 = vpow.pop %v1865
    %v1867 = vmul.f32 %v1836, 1.442695
    %v1868 = vpow.pop %v1867
    %v1869 = vadd.f32 %v1838, 1.0
    %v1870 = vlog2.pop %v1869
    %v1871 = vmul.f32 %v1870, 0.6931472
    %v1872 = vmul.f32 -0.5, %v1838
    %v1873 = vadd.f32 %v1872, 1.0
    %v1874 = vmul.f32 %v1873, %v1838
    %v1875 = vand.u32 2147483647, %v1838
    %vm1876 = vcmp.lt.f32.partialorder %v1875, 0.0004427343
    %v1877 = vsel %vm1876, %v1874, %v1871
    %v1878 = vadd.f32 %v1840, 1.0
    %v1879 = vlog2.pop %v1878
    %v1880 = vmul.f32 %v1879, 0.6931472
    %v1881 = vmul.f32 -0.5, %v1840
    %v1882 = vadd.f32 %v1881, 1.0
    %v1883 = vmul.f32 %v1882, %v1840
    %v1884 = vand.u32 2147483647, %v1840
    %vm1885 = vcmp.lt.f32.partialorder %v1884, 0.0004427343
    %v1886 = vsel %vm1885, %v1883, %v1880
    %v1887 = vadd.f32 %v1842, 1.0
    %v1888 = vlog2.pop %v1887
    %v1889 = vmul.f32 %v1888, 0.6931472
    %v1890 = vmul.f32 -0.5, %v1842
    %v1891 = vadd.f32 %v1890, 1.0
    %v1892 = vmul.f32 %v1891, %v1842
    %v1893 = vand.u32 2147483647, %v1842
    %vm1894 = vcmp.lt.f32.partialorder %v1893, 0.0004427343
    %v1895 = vsel %vm1894, %v1892, %v1889
    %v1896 = vadd.f32 %v1844, 1.0
    %v1897 = vlog2.pop %v1896
    %v1898 = vmul.f32 %v1897, 0.6931472
    %v1899 = vmul.f32 -0.5, %v1844
    %v1900 = vadd.f32 %v1899, 1.0
    %v1901 = vmul.f32 %v1900, %v1844
    %v1902 = vand.u32 2147483647, %v1844
    %vm1903 = vcmp.lt.f32.partialorder %v1902, 0.0004427343
    %v1904 = vsel %vm1903, %v1901, %v1898
    %v1905 = vadd.f32 %v1846, 1.0
    %v1906 = vlog2.pop %v1905
    %v1907 = vmul.f32 %v1906, 0.6931472
    %v1908 = vmul.f32 -0.5, %v1846
    %v1909 = vadd.f32 %v1908, 1.0
    %v1910 = vmul.f32 %v1909, %v1846
    %v1911 = vand.u32 2147483647, %v1846
    %vm1912 = vcmp.lt.f32.partialorder %v1911, 0.0004427343
    %v1913 = vsel %vm1912, %v1910, %v1907
    %v1914 = vadd.f32 %v1848, 1.0
    %v1915 = vlog2.pop %v1914
    %v1916 = vmul.f32 %v1915, 0.6931472
    %v1917 = vmul.f32 -0.5, %v1848
    %v1918 = vadd.f32 %v1917, 1.0
    %v1919 = vmul.f32 %v1918, %v1848
    %v1920 = vand.u32 2147483647, %v1848
    %vm1921 = vcmp.lt.f32.partialorder %v1920, 0.0004427343
    %v1922 = vsel %vm1921, %v1919, %v1916
    %v1923 = vadd.f32 %v1850, 1.0
    %v1924 = vlog2.pop %v1923
    %v1925 = vmul.f32 %v1924, 0.6931472
    %v1926 = vmul.f32 -0.5, %v1850
    %v1927 = vadd.f32 %v1926, 1.0
    %v1928 = vmul.f32 %v1927, %v1850
    %v1929 = vand.u32 2147483647, %v1850
    %vm1930 = vcmp.lt.f32.partialorder %v1929, 0.0004427343
    %v1931 = vsel %vm1930, %v1928, %v1925
    %v1932 = vadd.f32 %v1852, 1.0
    %v1933 = vlog2.pop %v1932
    %v1934 = vmul.f32 %v1933, 0.6931472
    %v1935 = vmul.f32 -0.5, %v1852
    %v1936 = vadd.f32 %v1935, 1.0
    %v1937 = vmul.f32 %v1936, %v1852
    %v1938 = vand.u32 2147483647, %v1852
    %vm1939 = vcmp.lt.f32.partialorder %v1938, 0.0004427343
    %v1940 = vsel %vm1939, %v1937, %v1934
    %v1941 = vadd.f32 %v1854, 1.0
    %v1942 = vlog2.pop %v1941
    %v1943 = vmul.f32 %v1942, 0.6931472
    %v1944 = vmul.f32 -0.5, %v1854
    %v1945 = vadd.f32 %v1944, 1.0
    %v1946 = vmul.f32 %v1945, %v1854
    %v1947 = vand.u32 2147483647, %v1854
    %vm1948 = vcmp.lt.f32.partialorder %v1947, 0.0004427343
    %v1949 = vsel %vm1948, %v1946, %v1943
    %v1950 = vadd.f32 %v1856, 1.0
    %v1951 = vlog2.pop %v1950
    %v1952 = vmul.f32 %v1951, 0.6931472
    %v1953 = vmul.f32 -0.5, %v1856
    %v1954 = vadd.f32 %v1953, 1.0
    %v1955 = vmul.f32 %v1954, %v1856
    %v1956 = vand.u32 2147483647, %v1856
    %vm1957 = vcmp.lt.f32.partialorder %v1956, 0.0004427343
    %v1958 = vsel %vm1957, %v1955, %v1952
    %v1959 = vadd.f32 %v1858, 1.0
    %v1960 = vlog2.pop %v1959
    %v1961 = vmul.f32 %v1960, 0.6931472
    %v1962 = vmul.f32 -0.5, %v1858
    %v1963 = vadd.f32 %v1962, 1.0
    %v1964 = vmul.f32 %v1963, %v1858
    %v1965 = vand.u32 2147483647, %v1858
    %vm1966 = vcmp.lt.f32.partialorder %v1965, 0.0004427343
    %v1967 = vsel %vm1966, %v1964, %v1961
    %v1968 = vadd.f32 %v1860, 1.0
    %v1969 = vlog2.pop %v1968
    %v1970 = vmul.f32 %v1969, 0.6931472
    %v1971 = vmul.f32 -0.5, %v1860
    %v1972 = vadd.f32 %v1971, 1.0
    %v1973 = vmul.f32 %v1972, %v1860
    %v1974 = vand.u32 2147483647, %v1860
    %vm1975 = vcmp.lt.f32.partialorder %v1974, 0.0004427343
    %v1976 = vsel %vm1975, %v1973, %v1970
    %v1977 = vadd.f32 %v1862, 1.0
    %v1978 = vlog2.pop %v1977
    %v1979 = vmul.f32 %v1978, 0.6931472
    %v1980 = vmul.f32 -0.5, %v1862
    %v1981 = vadd.f32 %v1980, 1.0
    %v1982 = vmul.f32 %v1981, %v1862
    %v1983 = vand.u32 2147483647, %v1862
    %vm1984 = vcmp.lt.f32.partialorder %v1983, 0.0004427343
    %v1985 = vsel %vm1984, %v1982, %v1979
    %v1986 = vadd.f32 %v1864, 1.0
    %v1987 = vlog2.pop %v1986
    %v1988 = vmul.f32 %v1987, 0.6931472
    %v1989 = vmul.f32 -0.5, %v1864
    %v1990 = vadd.f32 %v1989, 1.0
    %v1991 = vmul.f32 %v1990, %v1864
    %v1992 = vand.u32 2147483647, %v1864
    %vm1993 = vcmp.lt.f32.partialorder %v1992, 0.0004427343
    %v1994 = vsel %vm1993, %v1991, %v1988
    %v1995 = vadd.f32 %v1866, 1.0
    %v1996 = vlog2.pop %v1995
    %v1997 = vmul.f32 %v1996, 0.6931472
    %v1998 = vmul.f32 -0.5, %v1866
    %v1999 = vadd.f32 %v1998, 1.0
    %v2000 = vmul.f32 %v1999, %v1866
    %v2001 = vand.u32 2147483647, %v1866
    %vm2002 = vcmp.lt.f32.partialorder %v2001, 0.0004427343
    %v2003 = vsel %vm2002, %v2000, %v1997
    %v2004 = vadd.f32 %v1868, 1.0
    %v2005 = vlog2.pop %v2004
    %v2006 = vmul.f32 %v2005, 0.6931472
    %v2007 = vmul.f32 -0.5, %v1868
    %v2008 = vadd.f32 %v2007, 1.0
    %v2009 = vmul.f32 %v2008, %v1868
    %v2010 = vand.u32 2147483647, %v1868
    %vm2011 = vcmp.lt.f32.partialorder %v2010, 0.0004427343
    %v2012 = vsel %vm2011, %v2009, %v2006
    %vm2013 = vcmp.gt.f32.partialorder %v1775, 20.0
    %vm2014 = vcmp.gt.f32.partialorder %v1777, 20.0
    %vm2015 = vcmp.gt.f32.partialorder %v1781, 20.0
    %vm2016 = vcmp.gt.f32.partialorder %v1783, 20.0
    %vm2017 = vcmp.gt.f32.partialorder %v1787, 20.0
    %vm2018 = vcmp.gt.f32.partialorder %v1789, 20.0
    %vm2019 = vcmp.gt.f32.partialorder %v1793, 20.0
    %vm2020 = vcmp.gt.f32.partialorder %v1795, 20.0
    %vm2021 = vcmp.gt.f32.partialorder %v1799, 20.0
    %vm2022 = vcmp.gt.f32.partialorder %v1801, 20.0
    %vm2023 = vcmp.gt.f32.partialorder %v1805, 20.0
    %vm2024 = vcmp.gt.f32.partialorder %v1807, 20.0
    %vm2025 = vcmp.gt.f32.partialorder %v1811, 20.0
    %vm2026 = vcmp.gt.f32.partialorder %v1813, 20.0
    %vm2027 = vcmp.gt.f32.partialorder %v1817, 20.0
    %vm2028 = vcmp.gt.f32.partialorder %v1819, 20.0
    %v2029 = vsel %vm2013, %v1775, %v1877
    %v2030 = vsel %vm2014, %v1777, %v1886
    %v2031 = vsel %vm2015, %v1781, %v1895
    %v2032 = vsel %vm2016, %v1783, %v1904
    %v2033 = vsel %vm2017, %v1787, %v1913
    %v2034 = vsel %vm2018, %v1789, %v1922
    %v2035 = vsel %vm2019, %v1793, %v1931
    %v2036 = vsel %vm2020, %v1795, %v1940
    %v2037 = vsel %vm2021, %v1799, %v1949
    %v2038 = vsel %vm2022, %v1801, %v1958
    %v2039 = vsel %vm2023, %v1805, %v1967
    %v2040 = vsel %vm2024, %v1807, %v1976
    %v2041 = vsel %vm2025, %v1811, %v1985
    %v2042 = vsel %vm2026, %v1813, %v1994
    %v2043 = vsel %vm2027, %v1817, %v2003
    %v2044 = vsel %vm2028, %v1819, %v2012
    %v2045 = vld [vmem:[%s7] sm:$0xff]
    %v2046 = vld [vmem:[%s7 + $0x8] sm:$0xff]
    %v2047 = vld [vmem:[%s7 + $0x10] sm:$0xff]
    %v2048 = vld [vmem:[%s7 + $0x18] sm:$0xff]
    %v2049 = vld [vmem:[%s7 + $0x20] sm:$0xff]
    %v2050 = vld [vmem:[%s7 + $0x28] sm:$0xff]
    %v2051 = vld [vmem:[%s7 + $0x30] sm:$0xff]
    %v2052 = vld [vmem:[%s7 + $0x38] sm:$0xff]
    %v2053 = vld [vmem:[%s8] sm:$0xff]
    %v2054 = vld [vmem:[%s8 + $0x8] sm:$0xff]
    %v2055 = vld [vmem:[%s8 + $0x10] sm:$0xff]
    %v2056 = vld [vmem:[%s8 + $0x18] sm:$0xff]
    %v2057 = vld [vmem:[%s8 + $0x20] sm:$0xff]
    %v2058 = vld [vmem:[%s8 + $0x28] sm:$0xff]
    %v2059 = vld [vmem:[%s8 + $0x30] sm:$0xff]
    %v2060 = vld [vmem:[%s8 + $0x38] sm:$0xff]
    %2062 = vset.pattern.permute.xlu0 0
    %2063 = vperm.xlu0 %2062, %v2053
    %v2064 = vpop.permute.xlu0 %2063
    %2067 = vset.pattern.permute.xlu0 0
    %2068 = vperm.xlu0 %2067, %v2054
    %v2069 = vpop.permute.xlu0 %2068
    %2072 = vset.pattern.permute.xlu0 0
    %2073 = vperm.xlu0 %2072, %v2055
    %v2074 = vpop.permute.xlu0 %2073
    %2077 = vset.pattern.permute.xlu0 0
    %2078 = vperm.xlu0 %2077, %v2056
    %v2079 = vpop.permute.xlu0 %2078
    %2082 = vset.pattern.permute.xlu0 0
    %2083 = vperm.xlu0 %2082, %v2057
    %v2084 = vpop.permute.xlu0 %2083
    %2087 = vset.pattern.permute.xlu0 0
    %2088 = vperm.xlu0 %2087, %v2058
    %v2089 = vpop.permute.xlu0 %2088
    %2092 = vset.pattern.permute.xlu0 0
    %2093 = vperm.xlu0 %2092, %v2059
    %v2094 = vpop.permute.xlu0 %2093
    %2097 = vset.pattern.permute.xlu0 0
    %2098 = vperm.xlu0 %2097, %v2060
    %v2099 = vpop.permute.xlu0 %2098
    %vm2101 = vcmask 523264
    %v2103 = vsel %vm2101, %v2045, 0
    %v2106 = vsel %vm2101, %v2046, 0
    %v2109 = vsel %vm2101, %v2047, 0
    %v2112 = vsel %vm2101, %v2048, 0
    %v2115 = vsel %vm2101, %v2049, 0
    %v2118 = vsel %vm2101, %v2050, 0
    %v2121 = vsel %vm2101, %v2051, 0
    %v2124 = vsel %vm2101, %v2052, 0
    %2126 = vmatprep.subr.mxu0 %v2030
    %2127 = vmatpush1.msra.mxu0 %v2029
    %2128 = vmatprep.subr.mxu0 %v2032
    %2129 = vmatpush1.msra.mxu0 %v2031
    %2130 = vmatprep.subr.mxu0 %v2034
    %2131 = vmatpush1.msra.mxu0 %v2033
    %2132 = vmatprep.subr.mxu0 %v2036
    %2133 = vmatpush1.msra.mxu0 %v2035
    %2134 = vmatprep.subr.mxu0 %v2038
    %2135 = vmatpush1.msra.mxu0 %v2037
    %2136 = vmatprep.subr.mxu0 %v2040
    %2137 = vmatpush1.msra.mxu0 %v2039
    %2138 = vmatprep.subr.mxu0 %v2042
    %2139 = vmatpush1.msra.mxu0 %v2041
    %2140 = vmatprep.subr.mxu0 %v2044
    %2141 = vmatpush1.msra.mxu0 %v2043
    %2142 = vmatprep.subr.mxu0 0.0
    %2143 = vmatpush1.msra.mxu0 0.0
    %2144 = vmatprep.subr.mxu0 0.0
    %2145 = vmatpush1.msra.mxu0 0.0
    %2146 = vmatprep.subr.mxu0 0.0
    %2147 = vmatpush1.msra.mxu0 0.0
    %2148 = vmatprep.subr.mxu0 0.0
    %2149 = vmatpush1.msra.mxu0 0.0
    %2150 = vmatprep.subr.mxu0 0.0
    %2151 = vmatpush1.msra.mxu0 0.0
    %2152 = vmatprep.subr.mxu0 0.0
    %2153 = vmatpush1.msra.mxu0 0.0
    %2154 = vmatprep.subr.mxu0 0.0
    %2155 = vmatpush1.msra.mxu0 0.0
    %2156 = vmatprep.subr.mxu0 0.0
    %2157 = vmatpush1.msra.mxu0 0.0
    %2158 = vmatprep.subr.mxu0 0.0
    %2159 = vmatpush1.msra.mxu0 0.0
    %2160 = vmatprep.subr.mxu0 0.0
    %2161 = vmatpush1.msra.mxu0 0.0
    %2162 = vmatprep.subr.mxu0 0.0
    %2163 = vmatpush1.msra.mxu0 0.0
    %2164 = vmatprep.subr.mxu0 0.0
    %2165 = vmatpush1.msra.mxu0 0.0
    %2166 = vmatprep.subr.mxu0 0.0
    %2167 = vmatpush1.msra.mxu0 0.0
    %2168 = vmatprep.subr.mxu0 0.0
    %2169 = vmatpush1.msra.mxu0 0.0
    %2170 = vmatprep.subr.mxu0 0.0
    %2171 = vmatpush1.msra.mxu0 0.0
    %2172 = vmatprep.subr.mxu0 0.0
    %2173 = vmatpush1.msra.mxu0 0.0
    %2174 = vmatprep.subr.mxu0 0.0
    %2175 = vmatpush1.msra.mxu0 0.0
    %2176 = vmatprep.subr.mxu0 0.0
    %2177 = vmatpush1.msra.mxu0 0.0
    %2178 = vmatprep.subr.mxu0 0.0
    %2179 = vmatpush1.msra.mxu0 0.0
    %2180 = vmatprep.subr.mxu0 0.0
    %2181 = vmatpush1.msra.mxu0 0.0
    %2182 = vmatprep.subr.mxu0 0.0
    %2183 = vmatpush1.msra.mxu0 0.0
    %2184 = vmatprep.subr.mxu0 0.0
    %2185 = vmatpush1.msra.mxu0 0.0
    %2186 = vmatprep.subr.mxu0 0.0
    %2187 = vmatpush1.msra.mxu0 0.0
    %2188 = vmatprep.subr.mxu0 0.0
    %2189 = vmatpush1.msra.mxu0 0.0
    %2190 = vmatprep.mubr.f32.mxu0 0.0
    %2191 = vmatmul.mubr.f32.gmra.mrb[0].mxu0 %v2103
    %v2192 = vpop.f32.mrb[0].mxu0
    %v2193 = vadd.f32 %v2064, %v2192
    %v2194 = vpop.f32.mrb[0].mxu0
    %v2195 = vadd.f32 %v2064, %v2194
    %2196 = vmatprep.mubr.f32.mxu0 0.0
    %2197 = vmatmul.mubr.f32.gmra.mrb[0].mxu0 %v2106
    %v2198 = vpop.f32.mrb[0].mxu0
    %v2199 = vadd.f32 %v2069, %v2198
    %v2200 = vpop.f32.mrb[0].mxu0
    %v2201 = vadd.f32 %v2069, %v2200
    %2202 = vmatprep.mubr.f32.mxu0 0.0
    %2203 = vmatmul.mubr.f32.gmra.mrb[0].mxu0 %v2109
    %v2204 = vpop.f32.mrb[0].mxu0
    %v2205 = vadd.f32 %v2074, %v2204
    %v2206 = vpop.f32.mrb[0].mxu0
    %v2207 = vadd.f32 %v2074, %v2206
    %2208 = vmatprep.mubr.f32.mxu0 0.0
    %2209 = vmatmul.mubr.f32.gmra.mrb[0].mxu0 %v2112
    %v2210 = vpop.f32.mrb[0].mxu0
    %v2211 = vadd.f32 %v2079, %v2210
    %v2212 = vpop.f32.mrb[0].mxu0
    %v2213 = vadd.f32 %v2079, %v2212
    %2214 = vmatprep.mubr.f32.mxu0 0.0
    %2215 = vmatmul.mubr.f32.gmra.mrb[0].mxu0 %v2115
    %v2216 = vpop.f32.mrb[0].mxu0
    %v2217 = vadd.f32 %v2084, %v2216
    %v2218 = vpop.f32.mrb[0].mxu0
    %v2219 = vadd.f32 %v2084, %v2218
    %2220 = vmatprep.mubr.f32.mxu0 0.0
    %2221 = vmatmul.mubr.f32.gmra.mrb[0].mxu0 %v2118
    %v2222 = vpop.f32.mrb[0].mxu0
    %v2223 = vadd.f32 %v2089, %v2222
    %v2224 = vpop.f32.mrb[0].mxu0
    %v2225 = vadd.f32 %v2089, %v2224
    %2226 = vmatprep.mubr.f32.mxu0 0.0
    %2227 = vmatmul.mubr.f32.gmra.mrb[0].mxu0 %v2121
    %v2228 = vpop.f32.mrb[0].mxu0
    %v2229 = vadd.f32 %v2094, %v2228
    %v2230 = vpop.f32.mrb[0].mxu0
    %v2231 = vadd.f32 %v2094, %v2230
    %2232 = vmatprep.mubr.f32.mxu0 0.0
    %2233 = vmatmul.mubr.f32.gmra.mrb[0].mxu0 %v2124
    %v2234 = vpop.f32.mrb[0].mxu0
    %v2235 = vadd.f32 %v2099, %v2234
    %v2236 = vpop.f32.mrb[0].mxu0
    %v2237 = vadd.f32 %v2099, %v2236
    %2238 = vdwg.mxu0
    %v2239 = vmin.f32 %v2193, 20.0
    %v2240 = vmin.f32 %v2195, 20.0
    %v2241 = vmin.f32 %v2199, 20.0
    %v2242 = vmin.f32 %v2201, 20.0
    %v2243 = vmin.f32 %v2205, 20.0
    %v2244 = vmin.f32 %v2207, 20.0
    %v2245 = vmin.f32 %v2211, 20.0
    %v2246 = vmin.f32 %v2213, 20.0
    %v2247 = vmin.f32 %v2217, 20.0
    %v2248 = vmin.f32 %v2219, 20.0
    %v2249 = vmin.f32 %v2223, 20.0
    %v2250 = vmin.f32 %v2225, 20.0
    %v2251 = vmin.f32 %v2229, 20.0
    %v2252 = vmin.f32 %v2231, 20.0
    %v2253 = vmin.f32 %v2235, 20.0
    %v2254 = vmin.f32 %v2237, 20.0
    %v2255 = vmul.f32 %v2239, 1.442695
    %v2256 = vpow.pop %v2255
    %v2257 = vmul.f32 %v2240, 1.442695
    %v2258 = vpow.pop %v2257
    %v2259 = vmul.f32 %v2241, 1.442695
    %v2260 = vpow.pop %v2259
    %v2261 = vmul.f32 %v2242, 1.442695
    %v2262 = vpow.pop %v2261
    %v2263 = vmul.f32 %v2243, 1.442695
    %v2264 = vpow.pop %v2263
    %v2265 = vmul.f32 %v2244, 1.442695
    %v2266 = vpow.pop %v2265
    %v2267 = vmul.f32 %v2245, 1.442695
    %v2268 = vpow.pop %v2267
    %v2269 = vmul.f32 %v2246, 1.442695
    %v2270 = vpow.pop %v2269
    %v2271 = vmul.f32 %v2247, 1.442695
    %v2272 = vpow.pop %v2271
    %v2273 = vmul.f32 %v2248, 1.442695
    %v2274 = vpow.pop %v2273
    %v2275 = vmul.f32 %v2249, 1.442695
    %v2276 = vpow.pop %v2275
    %v2277 = vmul.f32 %v2250, 1.442695
    %v2278 = vpow.pop %v2277
    %v2279 = vmul.f32 %v2251, 1.442695
    %v2280 = vpow.pop %v2279
    %v2281 = vmul.f32 %v2252, 1.442695
    %v2282 = vpow.pop %v2281
    %v2283 = vmul.f32 %v2253, 1.442695
    %v2284 = vpow.pop %v2283
    %v2285 = vmul.f32 %v2254, 1.442695
    %v2286 = vpow.pop %v2285
    %v2287 = vadd.f32 %v2256, 1.0
    %v2288 = vlog2.pop %v2287
    %v2289 = vmul.f32 %v2288, 0.6931472
    %v2290 = vmul.f32 -0.5, %v2256
    %v2291 = vadd.f32 %v2290, 1.0
    %v2292 = vmul.f32 %v2291, %v2256
    %v2293 = vand.u32 2147483647, %v2256
    %vm2294 = vcmp.lt.f32.partialorder %v2293, 0.0004427343
    %v2295 = vsel %vm2294, %v2292, %v2289
    %v2296 = vadd.f32 %v2258, 1.0
    %v2297 = vlog2.pop %v2296
    %v2298 = vmul.f32 %v2297, 0.6931472
    %v2299 = vmul.f32 -0.5, %v2258
    %v2300 = vadd.f32 %v2299, 1.0
    %v2301 = vmul.f32 %v2300, %v2258
    %v2302 = vand.u32 2147483647, %v2258
    %vm2303 = vcmp.lt.f32.partialorder %v2302, 0.0004427343
    %v2304 = vsel %vm2303, %v2301, %v2298
    %v2305 = vadd.f32 %v2260, 1.0
    %v2306 = vlog2.pop %v2305
    %v2307 = vmul.f32 %v2306, 0.6931472
    %v2308 = vmul.f32 -0.5, %v2260
    %v2309 = vadd.f32 %v2308, 1.0
    %v2310 = vmul.f32 %v2309, %v2260
    %v2311 = vand.u32 2147483647, %v2260
    %vm2312 = vcmp.lt.f32.partialorder %v2311, 0.0004427343
    %v2313 = vsel %vm2312, %v2310, %v2307
    %v2314 = vadd.f32 %v2262, 1.0
    %v2315 = vlog2.pop %v2314
    %v2316 = vmul.f32 %v2315, 0.6931472
    %v2317 = vmul.f32 -0.5, %v2262
    %v2318 = vadd.f32 %v2317, 1.0
    %v2319 = vmul.f32 %v2318, %v2262
    %v2320 = vand.u32 2147483647, %v2262
    %vm2321 = vcmp.lt.f32.partialorder %v2320, 0.0004427343
    %v2322 = vsel %vm2321, %v2319, %v2316
    %v2323 = vadd.f32 %v2264, 1.0
    %v2324 = vlog2.pop %v2323
    %v2325 = vmul.f32 %v2324, 0.6931472
    %v2326 = vmul.f32 -0.5, %v2264
    %v2327 = vadd.f32 %v2326, 1.0
    %v2328 = vmul.f32 %v2327, %v2264
    %v2329 = vand.u32 2147483647, %v2264
    %vm2330 = vcmp.lt.f32.partialorder %v2329, 0.0004427343
    %v2331 = vsel %vm2330, %v2328, %v2325
    %v2332 = vadd.f32 %v2266, 1.0
    %v2333 = vlog2.pop %v2332
    %v2334 = vmul.f32 %v2333, 0.6931472
    %v2335 = vmul.f32 -0.5, %v2266
    %v2336 = vadd.f32 %v2335, 1.0
    %v2337 = vmul.f32 %v2336, %v2266
    %v2338 = vand.u32 2147483647, %v2266
    %vm2339 = vcmp.lt.f32.partialorder %v2338, 0.0004427343
    %v2340 = vsel %vm2339, %v2337, %v2334
    %v2341 = vadd.f32 %v2268, 1.0
    %v2342 = vlog2.pop %v2341
    %v2343 = vmul.f32 %v2342, 0.6931472
    %v2344 = vmul.f32 -0.5, %v2268
    %v2345 = vadd.f32 %v2344, 1.0
    %v2346 = vmul.f32 %v2345, %v2268
    %v2347 = vand.u32 2147483647, %v2268
    %vm2348 = vcmp.lt.f32.partialorder %v2347, 0.0004427343
    %v2349 = vsel %vm2348, %v2346, %v2343
    %v2350 = vadd.f32 %v2270, 1.0
    %v2351 = vlog2.pop %v2350
    %v2352 = vmul.f32 %v2351, 0.6931472
    %v2353 = vmul.f32 -0.5, %v2270
    %v2354 = vadd.f32 %v2353, 1.0
    %v2355 = vmul.f32 %v2354, %v2270
    %v2356 = vand.u32 2147483647, %v2270
    %vm2357 = vcmp.lt.f32.partialorder %v2356, 0.0004427343
    %v2358 = vsel %vm2357, %v2355, %v2352
    %v2359 = vadd.f32 %v2272, 1.0
    %v2360 = vlog2.pop %v2359
    %v2361 = vmul.f32 %v2360, 0.6931472
    %v2362 = vmul.f32 -0.5, %v2272
    %v2363 = vadd.f32 %v2362, 1.0
    %v2364 = vmul.f32 %v2363, %v2272
    %v2365 = vand.u32 2147483647, %v2272
    %vm2366 = vcmp.lt.f32.partialorder %v2365, 0.0004427343
    %v2367 = vsel %vm2366, %v2364, %v2361
    %v2368 = vadd.f32 %v2274, 1.0
    %v2369 = vlog2.pop %v2368
    %v2370 = vmul.f32 %v2369, 0.6931472
    %v2371 = vmul.f32 -0.5, %v2274
    %v2372 = vadd.f32 %v2371, 1.0
    %v2373 = vmul.f32 %v2372, %v2274
    %v2374 = vand.u32 2147483647, %v2274
    %vm2375 = vcmp.lt.f32.partialorder %v2374, 0.0004427343
    %v2376 = vsel %vm2375, %v2373, %v2370
    %v2377 = vadd.f32 %v2276, 1.0
    %v2378 = vlog2.pop %v2377
    %v2379 = vmul.f32 %v2378, 0.6931472
    %v2380 = vmul.f32 -0.5, %v2276
    %v2381 = vadd.f32 %v2380, 1.0
    %v2382 = vmul.f32 %v2381, %v2276
    %v2383 = vand.u32 2147483647, %v2276
    %vm2384 = vcmp.lt.f32.partialorder %v2383, 0.0004427343
    %v2385 = vsel %vm2384, %v2382, %v2379
    %v2386 = vadd.f32 %v2278, 1.0
    %v2387 = vlog2.pop %v2386
    %v2388 = vmul.f32 %v2387, 0.6931472
    %v2389 = vmul.f32 -0.5, %v2278
    %v2390 = vadd.f32 %v2389, 1.0
    %v2391 = vmul.f32 %v2390, %v2278
    %v2392 = vand.u32 2147483647, %v2278
    %vm2393 = vcmp.lt.f32.partialorder %v2392, 0.0004427343
    %v2394 = vsel %vm2393, %v2391, %v2388
    %v2395 = vadd.f32 %v2280, 1.0
    %v2396 = vlog2.pop %v2395
    %v2397 = vmul.f32 %v2396, 0.6931472
    %v2398 = vmul.f32 -0.5, %v2280
    %v2399 = vadd.f32 %v2398, 1.0
    %v2400 = vmul.f32 %v2399, %v2280
    %v2401 = vand.u32 2147483647, %v2280
    %vm2402 = vcmp.lt.f32.partialorder %v2401, 0.0004427343
    %v2403 = vsel %vm2402, %v2400, %v2397
    %v2404 = vadd.f32 %v2282, 1.0
    %v2405 = vlog2.pop %v2404
    %v2406 = vmul.f32 %v2405, 0.6931472
    %v2407 = vmul.f32 -0.5, %v2282
    %v2408 = vadd.f32 %v2407, 1.0
    %v2409 = vmul.f32 %v2408, %v2282
    %v2410 = vand.u32 2147483647, %v2282
    %vm2411 = vcmp.lt.f32.partialorder %v2410, 0.0004427343
    %v2412 = vsel %vm2411, %v2409, %v2406
    %v2413 = vadd.f32 %v2284, 1.0
    %v2414 = vlog2.pop %v2413
    %v2415 = vmul.f32 %v2414, 0.6931472
    %v2416 = vmul.f32 -0.5, %v2284
    %v2417 = vadd.f32 %v2416, 1.0
    %v2418 = vmul.f32 %v2417, %v2284
    %v2419 = vand.u32 2147483647, %v2284
    %vm2420 = vcmp.lt.f32.partialorder %v2419, 0.0004427343
    %v2421 = vsel %vm2420, %v2418, %v2415
    %v2422 = vadd.f32 %v2286, 1.0
    %v2423 = vlog2.pop %v2422
    %v2424 = vmul.f32 %v2423, 0.6931472
    %v2425 = vmul.f32 -0.5, %v2286
    %v2426 = vadd.f32 %v2425, 1.0
    %v2427 = vmul.f32 %v2426, %v2286
    %v2428 = vand.u32 2147483647, %v2286
    %vm2429 = vcmp.lt.f32.partialorder %v2428, 0.0004427343
    %v2430 = vsel %vm2429, %v2427, %v2424
    %vm2431 = vcmp.gt.f32.partialorder %v2193, 20.0
    %vm2432 = vcmp.gt.f32.partialorder %v2195, 20.0
    %vm2433 = vcmp.gt.f32.partialorder %v2199, 20.0
    %vm2434 = vcmp.gt.f32.partialorder %v2201, 20.0
    %vm2435 = vcmp.gt.f32.partialorder %v2205, 20.0
    %vm2436 = vcmp.gt.f32.partialorder %v2207, 20.0
    %vm2437 = vcmp.gt.f32.partialorder %v2211, 20.0
    %vm2438 = vcmp.gt.f32.partialorder %v2213, 20.0
    %vm2439 = vcmp.gt.f32.partialorder %v2217, 20.0
    %vm2440 = vcmp.gt.f32.partialorder %v2219, 20.0
    %vm2441 = vcmp.gt.f32.partialorder %v2223, 20.0
    %vm2442 = vcmp.gt.f32.partialorder %v2225, 20.0
    %vm2443 = vcmp.gt.f32.partialorder %v2229, 20.0
    %vm2444 = vcmp.gt.f32.partialorder %v2231, 20.0
    %vm2445 = vcmp.gt.f32.partialorder %v2235, 20.0
    %vm2446 = vcmp.gt.f32.partialorder %v2237, 20.0
    %v2447 = vsel %vm2431, %v2193, %v2295
    %v2448 = vsel %vm2432, %v2195, %v2304
    %v2449 = vsel %vm2433, %v2199, %v2313
    %v2450 = vsel %vm2434, %v2201, %v2322
    %v2451 = vsel %vm2435, %v2205, %v2331
    %v2452 = vsel %vm2436, %v2207, %v2340
    %v2453 = vsel %vm2437, %v2211, %v2349
    %v2454 = vsel %vm2438, %v2213, %v2358
    %v2455 = vsel %vm2439, %v2217, %v2367
    %v2456 = vsel %vm2440, %v2219, %v2376
    %v2457 = vsel %vm2441, %v2223, %v2385
    %v2458 = vsel %vm2442, %v2225, %v2394
    %v2459 = vsel %vm2443, %v2229, %v2403
    %v2460 = vsel %vm2444, %v2231, %v2412
    %v2461 = vsel %vm2445, %v2235, %v2421
    %v2462 = vsel %vm2446, %v2237, %v2430
    %v2463 = vmul.f32 %v2447, %v2447
    %v2464 = vmul.f32 %v2448, %v2448
    %v2465 = vmul.f32 %v2449, %v2449
    %v2466 = vmul.f32 %v2450, %v2450
    %v2467 = vmul.f32 %v2451, %v2451
    %v2468 = vmul.f32 %v2452, %v2452
    %v2469 = vmul.f32 %v2453, %v2453
    %v2470 = vmul.f32 %v2454, %v2454
    %v2471 = vmul.f32 %v2455, %v2455
    %v2472 = vmul.f32 %v2456, %v2456
    %v2473 = vmul.f32 %v2457, %v2457
    %v2474 = vmul.f32 %v2458, %v2458
    %v2475 = vmul.f32 %v2459, %v2459
    %v2476 = vmul.f32 %v2460, %v2460
    %v2477 = vmul.f32 %v2461, %v2461
    %v2478 = vmul.f32 %v2462, %v2462
    %v2479 = vadd.f32 %v2463, %v2465
    %v2480 = vadd.f32 %v2479, %v2467
    %v2481 = vadd.f32 %v2480, %v2469
    %v2482 = vadd.f32 %v2481, %v2471
    %v2483 = vadd.f32 %v2482, %v2473
    %v2484 = vadd.f32 %v2483, %v2475
    %v2485 = vadd.f32 %v2484, %v2477
    %v2486 = vrot.slane %v2485, 4
    %v2487 = vadd.f32 %v2485, %v2486
    %v2488 = vrot.slane %v2487, 2
    %v2489 = vadd.f32 %v2487, %v2488
    %v2490 = vrot.slane %v2489, 1
    %v2491 = vadd.f32 %v2489, %v2490
    %v2492 = vadd.f32 %v2464, %v2466
    %v2493 = vadd.f32 %v2492, %v2468
    %v2494 = vadd.f32 %v2493, %v2470
    %v2495 = vadd.f32 %v2494, %v2472
    %v2496 = vadd.f32 %v2495, %v2474
    %v2497 = vadd.f32 %v2496, %v2476
    %v2498 = vadd.f32 %v2497, %v2478
    %v2499 = vrot.slane %v2498, 4
    %v2500 = vadd.f32 %v2498, %v2499
    %v2501 = vrot.slane %v2500, 2
    %v2502 = vadd.f32 %v2500, %v2501
    %v2503 = vrot.slane %v2502, 1
    %v2504 = vadd.f32 %v2502, %v2503
    %v2507 = vcombine.low %v2491, %v2504
    %v2509 = vunpack.c.l.s4 1966171168
    %v2510 = vunpack.c.0.s8 %v2509
    %v2511 = vlaneseq
    %v2512 = vshrl.u32 %v2511, 7
    %v2513 = vsub.s32 %v2510, %v2512
    %v2514 = vrot.slane %v2507, %v2513
    %v2516 = vunpack.c.l.s4 1966171168
    %v2517 = vunpack.c.0.s8 %v2516
    %v2518 = vlaneseq
    %v2519 = vshrl.u32 %v2518, 7
    %v2520 = vsub.s32 %v2517, %v2519
    %v2521 = vrot.slane %v2514, %v2520
    %v2523 = vlaneseq
    %vm2524 = vcmp.ge.s32.totalorder %v2523, 0
    %vm2525 = vcmp.lt.s32.totalorder %v2523, 256
    %vm2526 = vmand %vm2524, %vm2525
    %2527 = vst.msk [vmem:[#allocation2] sm:$0x3] %vm2526, %v2521
    // Predicated region
    $region38: #{tpu_custom_call.1} parent=1 // pred_check
      _
    $region39: #{tpu_custom_call.1} parent=1 // pred_check_branch
      %2529 = sbr.rel (0) target = $region41
    $region40: #{tpu_custom_call.1} parent=1 // pred_region
      %s2531 = ssub.s32 32, 32
      %2532 = vsyncadd [#allocation3], %s2531
      %s2534 = sshll.u32 [#allocation2], 4
      %s2535 = int_to_ptr.vmem [resolvable:$true] %s2534
      %2537 = dma.vmem_to_hbm [thread:$0]  %s2535, 32, %s9, [#allocation3]
    $region41: #{tpu_custom_call.1} parent=1 // pred_fallthru
      _
    // Predicated region
    $region42: #{tpu_custom_call.1} parent=1 // pred_check
      _
    $region43: #{tpu_custom_call.1} parent=1 // pred_check_branch
      %2539 = sbr.rel (0) target = $region45
    $region44: #{tpu_custom_call.1} parent=1 // pred_region
      %2540 = dma.done [#allocation3], 32
    $region45: #{tpu_custom_call.1} parent=1 // pred_fallthru
      _
    %2541 = vsyncpa [#allocation3], 1

</llo_original>
